<compile_context>
chip_gen: v6e
topology: v6e:2x2x1
jax: 0.10.0
libtpu: 0.0.40
codegen_flags: <defaults>
</compile_context>

<pallas_src>
import functools

import jax
import jax.numpy as jnp
from jax.experimental import pallas as pl
from jax.experimental.pallas import tpu as pltpu


def _round_up(n, m):
    return (n + m - 1) // m * m


def _mlp_kernel(x_ref, w1_ref, b1_ref, w2_ref, b2_ref, w3_ref, b3_ref,
                w4_ref, b4_ref, w5_ref, b5_ref, o_ref):
    """Fused MLP forward for one batch tile.

    x_ref  : (TB, 784)   f32 (native layout; cast to bf16 on-chip)
    wK_ref : (inK, outK) bf16 (lane-padded out-dims)   bK_ref : (1, outK) f32
    o_ref  : (TB, 128)   f32 log-probabilities (only first 10 lanes meaningful)
    """
    # fc1 + ReLU  (bf16 cast happens here, not in the wrapper)
    x = x_ref[...].astype(jnp.bfloat16)
    h = jnp.dot(x, w1_ref[...], preferred_element_type=jnp.float32) + b1_ref[...]
    h = jnp.maximum(h, 0.0)

    # fc2 + ReLU (+ dropout)
    h = jnp.dot(h.astype(jnp.bfloat16), w2_ref[...],
                preferred_element_type=jnp.float32) + b2_ref[...]
    h = jnp.maximum(h, 0.0)
    # TODO(synk): training-mode dropout (p=drop_p) after fc2 omitted -- eval-mode dropout is identity.

    # fc3 + ReLU
    h = jnp.dot(h.astype(jnp.bfloat16), w3_ref[...],
                preferred_element_type=jnp.float32) + b3_ref[...]
    h = jnp.maximum(h, 0.0)

    # fc4 + ReLU (padded columns have zero weights/bias -> stay exactly 0 after ReLU)
    h = jnp.dot(h.astype(jnp.bfloat16), w4_ref[...],
                preferred_element_type=jnp.float32) + b4_ref[...]
    h = jnp.maximum(h, 0.0)

    # fc5 + log_softmax over last dim (padded logits carry bias -1e9 -> exp underflows to 0,
    # so the normalizer matches the unpadded 10-class result exactly)
    logits = jnp.dot(h.astype(jnp.bfloat16), w5_ref[...],
                     preferred_element_type=jnp.float32) + b5_ref[...]
    m = jnp.max(logits, axis=-1, keepdims=True)
    shifted = logits - m
    lse = jnp.log(jnp.sum(jnp.exp(shifted), axis=-1, keepdims=True))
    o_ref[...] = shifted - lse


def prepare_params(params):
    """One-time weight prep (pad + bf16 cast), hoisted out of the per-call forward.

    Returns (w1, b1, ..., w5, b5) with:
      * weights bf16, out-dims lane-padded to multiples of 128
        (w1 keeps its native 784-row contraction dim so x needs no column padding),
      * biases f32 shaped (1, out_pad); padded b5 lanes filled with -1e9.
    """
    def pad_w(w, pad_in):
        fi, fo = w.shape
        fi_p = _round_up(fi, 128) if pad_in else fi
        fo_p = _round_up(fo, 128)
        w = jnp.pad(w, ((0, fi_p - fi), (0, fo_p - fo)))
        return w.astype(jnp.bfloat16)

    def pad_b(b, fill):
        fo = b.shape[-1]
        b2 = b.reshape(1, fo).astype(jnp.float32)
        return jnp.pad(b2, ((0, 0), (0, _round_up(fo, 128) - fo)), constant_values=fill)

    prepped = []
    for k in range(1, 6):
        prepped.append(pad_w(params[f"w{k}"], pad_in=(k != 1)))
        prepped.append(pad_b(params[f"b{k}"], fill=(-1e9 if k == 5 else 0.0)))
    return tuple(prepped)


def _choose_batch_tile(B, batch_tile):
    """Pick an MXU/DMA-friendly batch tile.

    Rules: big tiles (amortize ~0.35us/step overhead), multiple of 128 when tiling,
    padding waste < ~25% of B, and >= 2 grid steps for modest batches so the v7x
    second TensorCore gets work.  A single whole-batch block is always layout-legal.
    """
    batch_tile = max(128, _round_up(batch_tile, 128))
    if B <= batch_tile:
        if B >= 256 and B % 16 == 0:
            return B // 2           # two 8-aligned tiles -> both TCs busy on v7x
        return B                    # one block == full array dim (always legal)
    tile = batch_tile
    while tile > 128 and (_round_up(B, tile) - B) * 4 > B:
        tile -= 128                 # keep zero-pad waste below ~25% of B
    return tile


def mlp_forward(x, prepped_params, *, batch_tile=512):
    """x: (B, 784) float32. prepped_params: output of prepare_params. Returns (B, 10) log-probs."""
    B, D = x.shape
    assert D == 784
    w1, b1, w2, b2, w3, b3, w4, b4, w5, b5 = prepped_params

    tile = _choose_batch_tile(B, batch_tile)
    B_pad = _round_up(B, tile)
    xp = x if B_pad == B else jnp.pad(x, ((0, B_pad - B), (0, 0)))

    out_pad = w5.shape[1]           # 128 (lane-dense output block)
    n_steps = B_pad // tile

    # x is the only streamed operand; deepen its pipeline at small tiles.
    if tile <= 256 and n_steps >= 3:
        x_spec = pl.BlockSpec((tile, D), lambda i: (i, 0), pipeline_mode=pl.Buffered(3))
    else:
        x_spec = pl.BlockSpec((tile, D), lambda i: (i, 0))

    def full_spec(arr):
        nd = arr.ndim
        return pl.BlockSpec(arr.shape, lambda i, _nd=nd: (0,) * _nd)

    in_specs = [x_spec]
    for w, b in ((w1, b1), (w2, b2), (w3, b3), (w4, b4), (w5, b5)):
        in_specs.append(full_spec(w))
        in_specs.append(full_spec(b))

    out = pl.pallas_call(
        _mlp_kernel,
        out_shape=jax.ShapeDtypeStruct((B_pad, out_pad), jnp.float32),
        grid_spec=pl.GridSpec(
            grid=(n_steps,),
            in_specs=in_specs,
            out_specs=pl.BlockSpec((tile, out_pad), lambda i: (i, 0)),
        ),
        compiler_params=pltpu.CompilerParams(
            dimension_semantics=("parallel",),
            vmem_limit_bytes=32 * 1024 * 1024),
    )(xp, w1, b1, w2, b2, w3, b3, w4, b4, w5, b5)

    return out[:B, :10]


def init_params(key, hidden1, hidden2, hidden3, hidden4):
    """Deterministic init mimicking nn.Linear's U(-1/sqrt(fan_in), 1/sqrt(fan_in)).
    Weights stored as (in_features, out_features); biases as (out_features,)."""
    dims = [(784, hidden1), (hidden1, hidden2), (hidden2, hidden3),
            (hidden3, hidden4), (hidden4, 10)]
    params = {}
    for idx, (fan_in, fan_out) in enumerate(dims, start=1):
        key, kw, kb = jax.random.split(key, 3)
        bound = 1.0 / jnp.sqrt(float(fan_in))
        params[f"w{idx}"] = jax.random.uniform(
            kw, (fan_in, fan_out), jnp.float32, minval=-bound, maxval=bound)
        params[f"b{idx}"] = jax.random.uniform(
            kb, (fan_out,), jnp.float32, minval=-bound, maxval=bound)
    return params


def reference_forward(x, params, *, bf16_matmul=False):
    """Pure-JAX reference. With bf16_matmul=True it mimics the kernel's mixed precision."""
    def layer(h, w, b):
        if bf16_matmul:
            h = h.astype(jnp.bfloat16)
            w = w.astype(jnp.bfloat16)
        return jnp.dot(h, w, preferred_element_type=jnp.float32) + b

    h = jnp.maximum(layer(x, params["w1"], params["b1"]), 0.0)
    h = jnp.maximum(layer(h, params["w2"], params["b2"]), 0.0)  # eval-mode dropout = identity
    h = jnp.maximum(layer(h, params["w3"], params["b3"]), 0.0)
    h = jnp.maximum(layer(h, params["w4"], params["b4"]), 0.0)
    logits = layer(h, params["w5"], params["b5"])
    return jax.nn.log_softmax(logits, axis=-1)


if __name__ == "__main__":
    # small, deterministic example
    hidden1, hidden2, hidden3, hidden4, drop_p = 256, 128, 128, 64, 0.2
    batch = 16

    key = jax.random.PRNGKey(0)
    key, kx = jax.random.split(key)
    x = jax.random.normal(kx, (batch, 784), dtype=jnp.float32)
    params = init_params(key, hidden1, hidden2, hidden3, hidden4)

    # one-time weight preparation (padding + bf16 cast), outside the hot path
    prepped = prepare_params(params)

    run = jax.jit(functools.partial(mlp_forward, batch_tile=512))
    out = run(x, prepped)
    out = jax.block_until_ready(out)

    # compare against a reference that uses the same bf16-matmul / f32-accumulate precision
    ref = reference_forward(x, params, bf16_matmul=True)
    assert out.shape == (batch, 10)
    assert jnp.allclose(out, ref, atol=2e-3, rtol=2e-3), "mismatch vs reference"
    # log-probs should exponentiate-sum to ~1
    assert jnp.allclose(jnp.exp(out).sum(-1), 1.0, atol=1e-4)

    print("KERNEL_OK")
</pallas_src>

<mosaic_0001>
module attributes {stable_mosaic.version = 11 : i64} {
  func.func @_mlp_kernel(%arg0: i32, %arg1: memref<16x784xf32, #tpu.memory_space<vmem>>, %arg2: memref<784x256xbf16, #tpu.memory_space<vmem>>, %arg3: memref<1x256xf32, #tpu.memory_space<vmem>>, %arg4: memref<256x128xbf16, #tpu.memory_space<vmem>>, %arg5: memref<1x128xf32, #tpu.memory_space<vmem>>, %arg6: memref<128x128xbf16, #tpu.memory_space<vmem>>, %arg7: memref<1x128xf32, #tpu.memory_space<vmem>>, %arg8: memref<128x128xbf16, #tpu.memory_space<vmem>>, %arg9: memref<1x128xf32, #tpu.memory_space<vmem>>, %arg10: memref<128x128xbf16, #tpu.memory_space<vmem>>, %arg11: memref<1x128xf32, #tpu.memory_space<vmem>>, %arg12: memref<16x128xf32, #tpu.memory_space<vmem>>) attributes {dimension_semantics = [#tpu.dimension_semantics<parallel>], iteration_bounds = array<i64: 1>, scalar_prefetch = 0 : i64, scratch_operands = 0 : i64, tpu.core_type = #tpu.core_type<tc>, window_params = [{transform_indices = @transform_0, window_bounds = array<i64: 16, 784>}, {pipeline_mode = #tpu.pipeline_mode<synchronous>, transform_indices = @transform_1, window_bounds = array<i64: 784, 256>}, {pipeline_mode = #tpu.pipeline_mode<synchronous>, transform_indices = @transform_2, window_bounds = array<i64: 1, 256>}, {pipeline_mode = #tpu.pipeline_mode<synchronous>, transform_indices = @transform_3, window_bounds = array<i64: 256, 128>}, {pipeline_mode = #tpu.pipeline_mode<synchronous>, transform_indices = @transform_4, window_bounds = array<i64: 1, 128>}, {pipeline_mode = #tpu.pipeline_mode<synchronous>, transform_indices = @transform_5, window_bounds = array<i64: 128, 128>}, {pipeline_mode = #tpu.pipeline_mode<synchronous>, transform_indices = @transform_6, window_bounds = array<i64: 1, 128>}, {pipeline_mode = #tpu.pipeline_mode<synchronous>, transform_indices = @transform_7, window_bounds = array<i64: 128, 128>}, {pipeline_mode = #tpu.pipeline_mode<synchronous>, transform_indices = @transform_8, window_bounds = array<i64: 1, 128>}, {pipeline_mode = #tpu.pipeline_mode<synchronous>, transform_indices = @transform_9, window_bounds = array<i64: 128, 128>}, {pipeline_mode = #tpu.pipeline_mode<synchronous>, transform_indices = @transform_10, window_bounds = array<i64: 1, 128>}, {transform_indices = @transform_11, window_bounds = array<i64: 16, 128>}]} {
    %c0 = arith.constant 0 : index
    %c0_0 = arith.constant 0 : index
    %0 = vector.load %arg1[%c0, %c0_0] : memref<16x784xf32, #tpu.memory_space<vmem>>, vector<16x784xf32>
    %1 = arith.truncf %0 : vector<16x784xf32> to vector<16x784xbf16>
    %c0_1 = arith.constant 0 : index
    %c0_2 = arith.constant 0 : index
    %2 = vector.load %arg2[%c0_1, %c0_2] : memref<784x256xbf16, #tpu.memory_space<vmem>>, vector<784x256xbf16>
    %cst = arith.constant dense<0.000000e+00> : vector<16x256xf32>
    %3 = tpu.matmul %1, %2, %cst {dimension_numbers = #tpu.dot_dimension_numbers<[1], [0], [0], [1], [0, 0, 1, 1], [], []>} : vector<16x784xbf16>, vector<784x256xbf16>, vector<16x256xf32> -> vector<16x256xf32>
    %c0_3 = arith.constant 0 : index
    %c0_4 = arith.constant 0 : index
    %4 = vector.load %arg3[%c0_3, %c0_4] : memref<1x256xf32, #tpu.memory_space<vmem>>, vector<1x256xf32>
    %5 = vector.broadcast %4 : vector<1x256xf32> to vector<16x256xf32>
    %6 = arith.addf %3, %5 : vector<16x256xf32>
    %cst_5 = arith.constant 0.000000e+00 : f32
    %7 = vector.broadcast %cst_5 : f32 to vector<16x256xf32>
    %8 = arith.maximumf %6, %7 : vector<16x256xf32>
    %9 = arith.truncf %8 : vector<16x256xf32> to vector<16x256xbf16>
    %c0_6 = arith.constant 0 : index
    %c0_7 = arith.constant 0 : index
    %10 = vector.load %arg4[%c0_6, %c0_7] : memref<256x128xbf16, #tpu.memory_space<vmem>>, vector<256x128xbf16>
    %cst_8 = arith.constant dense<0.000000e+00> : vector<16x128xf32>
    %11 = tpu.matmul %9, %10, %cst_8 {dimension_numbers = #tpu.dot_dimension_numbers<[1], [0], [0], [1], [0, 0, 1, 1], [], []>} : vector<16x256xbf16>, vector<256x128xbf16>, vector<16x128xf32> -> vector<16x128xf32>
    %c0_9 = arith.constant 0 : index
    %c0_10 = arith.constant 0 : index
    %12 = vector.load %arg5[%c0_9, %c0_10] : memref<1x128xf32, #tpu.memory_space<vmem>>, vector<1x128xf32>
    %13 = vector.broadcast %12 : vector<1x128xf32> to vector<16x128xf32>
    %14 = arith.addf %11, %13 : vector<16x128xf32>
    %cst_11 = arith.constant 0.000000e+00 : f32
    %15 = vector.broadcast %cst_11 : f32 to vector<16x128xf32>
    %16 = arith.maximumf %14, %15 : vector<16x128xf32>
    %17 = arith.truncf %16 : vector<16x128xf32> to vector<16x128xbf16>
    %c0_12 = arith.constant 0 : index
    %c0_13 = arith.constant 0 : index
    %18 = vector.load %arg6[%c0_12, %c0_13] : memref<128x128xbf16, #tpu.memory_space<vmem>>, vector<128x128xbf16>
    %cst_14 = arith.constant dense<0.000000e+00> : vector<16x128xf32>
    %19 = tpu.matmul %17, %18, %cst_14 {dimension_numbers = #tpu.dot_dimension_numbers<[1], [0], [0], [1], [0, 0, 1, 1], [], []>} : vector<16x128xbf16>, vector<128x128xbf16>, vector<16x128xf32> -> vector<16x128xf32>
    %c0_15 = arith.constant 0 : index
    %c0_16 = arith.constant 0 : index
    %20 = vector.load %arg7[%c0_15, %c0_16] : memref<1x128xf32, #tpu.memory_space<vmem>>, vector<1x128xf32>
    %21 = vector.broadcast %20 : vector<1x128xf32> to vector<16x128xf32>
    %22 = arith.addf %19, %21 : vector<16x128xf32>
    %cst_17 = arith.constant 0.000000e+00 : f32
    %23 = vector.broadcast %cst_17 : f32 to vector<16x128xf32>
    %24 = arith.maximumf %22, %23 : vector<16x128xf32>
    %25 = arith.truncf %24 : vector<16x128xf32> to vector<16x128xbf16>
    %c0_18 = arith.constant 0 : index
    %c0_19 = arith.constant 0 : index
    %26 = vector.load %arg8[%c0_18, %c0_19] : memref<128x128xbf16, #tpu.memory_space<vmem>>, vector<128x128xbf16>
    %cst_20 = arith.constant dense<0.000000e+00> : vector<16x128xf32>
    %27 = tpu.matmul %25, %26, %cst_20 {dimension_numbers = #tpu.dot_dimension_numbers<[1], [0], [0], [1], [0, 0, 1, 1], [], []>} : vector<16x128xbf16>, vector<128x128xbf16>, vector<16x128xf32> -> vector<16x128xf32>
    %c0_21 = arith.constant 0 : index
    %c0_22 = arith.constant 0 : index
    %28 = vector.load %arg9[%c0_21, %c0_22] : memref<1x128xf32, #tpu.memory_space<vmem>>, vector<1x128xf32>
    %29 = vector.broadcast %28 : vector<1x128xf32> to vector<16x128xf32>
    %30 = arith.addf %27, %29 : vector<16x128xf32>
    %cst_23 = arith.constant 0.000000e+00 : f32
    %31 = vector.broadcast %cst_23 : f32 to vector<16x128xf32>
    %32 = arith.maximumf %30, %31 : vector<16x128xf32>
    %33 = arith.truncf %32 : vector<16x128xf32> to vector<16x128xbf16>
    %c0_24 = arith.constant 0 : index
    %c0_25 = arith.constant 0 : index
    %34 = vector.load %arg10[%c0_24, %c0_25] : memref<128x128xbf16, #tpu.memory_space<vmem>>, vector<128x128xbf16>
    %cst_26 = arith.constant dense<0.000000e+00> : vector<16x128xf32>
    %35 = tpu.matmul %33, %34, %cst_26 {dimension_numbers = #tpu.dot_dimension_numbers<[1], [0], [0], [1], [0, 0, 1, 1], [], []>} : vector<16x128xbf16>, vector<128x128xbf16>, vector<16x128xf32> -> vector<16x128xf32>
    %c0_27 = arith.constant 0 : index
    %c0_28 = arith.constant 0 : index
    %36 = vector.load %arg11[%c0_27, %c0_28] : memref<1x128xf32, #tpu.memory_space<vmem>>, vector<1x128xf32>
    %37 = vector.broadcast %36 : vector<1x128xf32> to vector<16x128xf32>
    %38 = arith.addf %35, %37 : vector<16x128xf32>
    %cst_29 = arith.constant dense<0xFF800000> : vector<16xf32>
    %39 = vector.multi_reduction <maximumf>, %38, %cst_29 [1] : vector<16x128xf32> to vector<16xf32>
    %40 = vector.shape_cast %39 : vector<16xf32> to vector<16x1xf32>
    %41 = vector.broadcast %40 : vector<16x1xf32> to vector<16x128xf32>
    %42 = arith.subf %38, %41 : vector<16x128xf32>
    %43 = math.exp %42 : vector<16x128xf32>
    %cst_30 = arith.constant dense<0.000000e+00> : vector<16xf32>
    %44 = vector.multi_reduction <add>, %43, %cst_30 [1] : vector<16x128xf32> to vector<16xf32>
    %45 = vector.shape_cast %44 : vector<16xf32> to vector<16x1xf32>
    %46 = math.log %45 : vector<16x1xf32>
    %47 = vector.broadcast %46 : vector<16x1xf32> to vector<16x128xf32>
    %48 = arith.subf %42, %47 : vector<16x128xf32>
    %c0_31 = arith.constant 0 : index
    %c0_32 = arith.constant 0 : index
    %49 = vector.load %arg12[%c0_31, %c0_32] : memref<16x128xf32, #tpu.memory_space<vmem>>, vector<16x128xf32>
    tpu.vector_store %arg12[%c0_31, %c0_32], %48 {strides = array<i32>} : memref<16x128xf32, #tpu.memory_space<vmem>>, vector<16x128xf32>,
    return
  }
  func.func @transform_0(%arg0: i32) -> (i32, i32) {
    %c0_i32 = arith.constant 0 : i32
    %c0_i32_0 = arith.constant 0 : i32
    return %arg0, %c0_i32 : i32, i32
  }
  func.func @transform_1(%arg0: i32) -> (i32, i32) {
    %c0_i32 = arith.constant 0 : i32
    %c0_i32_0 = arith.constant 0 : i32
    %c0_i32_1 = arith.constant 0 : i32
    return %c0_i32, %c0_i32_0 : i32, i32
  }
  func.func @transform_2(%arg0: i32) -> (i32, i32) {
    %c0_i32 = arith.constant 0 : i32
    %c0_i32_0 = arith.constant 0 : i32
    %c0_i32_1 = arith.constant 0 : i32
    return %c0_i32, %c0_i32_0 : i32, i32
  }
  func.func @transform_3(%arg0: i32) -> (i32, i32) {
    %c0_i32 = arith.constant 0 : i32
    %c0_i32_0 = arith.constant 0 : i32
    %c0_i32_1 = arith.constant 0 : i32
    return %c0_i32, %c0_i32_0 : i32, i32
  }
  func.func @transform_4(%arg0: i32) -> (i32, i32) {
    %c0_i32 = arith.constant 0 : i32
    %c0_i32_0 = arith.constant 0 : i32
    %c0_i32_1 = arith.constant 0 : i32
    return %c0_i32, %c0_i32_0 : i32, i32
  }
  func.func @transform_5(%arg0: i32) -> (i32, i32) {
    %c0_i32 = arith.constant 0 : i32
    %c0_i32_0 = arith.constant 0 : i32
    %c0_i32_1 = arith.constant 0 : i32
    return %c0_i32, %c0_i32_0 : i32, i32
  }
  func.func @transform_6(%arg0: i32) -> (i32, i32) {
    %c0_i32 = arith.constant 0 : i32
    %c0_i32_0 = arith.constant 0 : i32
    %c0_i32_1 = arith.constant 0 : i32
    return %c0_i32, %c0_i32_0 : i32, i32
  }
  func.func @transform_7(%arg0: i32) -> (i32, i32) {
    %c0_i32 = arith.constant 0 : i32
    %c0_i32_0 = arith.constant 0 : i32
    %c0_i32_1 = arith.constant 0 : i32
    return %c0_i32, %c0_i32_0 : i32, i32
  }
  func.func @transform_8(%arg0: i32) -> (i32, i32) {
    %c0_i32 = arith.constant 0 : i32
    %c0_i32_0 = arith.constant 0 : i32
    %c0_i32_1 = arith.constant 0 : i32
    return %c0_i32, %c0_i32_0 : i32, i32
  }
  func.func @transform_9(%arg0: i32) -> (i32, i32) {
    %c0_i32 = arith.constant 0 : i32
    %c0_i32_0 = arith.constant 0 : i32
    %c0_i32_1 = arith.constant 0 : i32
    return %c0_i32, %c0_i32_0 : i32, i32
  }
  func.func @transform_10(%arg0: i32) -> (i32, i32) {
    %c0_i32 = arith.constant 0 : i32
    %c0_i32_0 = arith.constant 0 : i32
    %c0_i32_1 = arith.constant 0 : i32
    return %c0_i32, %c0_i32_0 : i32, i32
  }
  func.func @transform_11(%arg0: i32) -> (i32, i32) {
    %c0_i32 = arith.constant 0 : i32
    %c0_i32_0 = arith.constant 0 : i32
    return %arg0, %c0_i32 : i32, i32
  }
}

</mosaic_0001>

<llo_original>
// kernel: mlp_forward.1
$region0: #{mlp_forward.1}
  #allocation0 [shape = 'u32[]', space=smem, size = 0x4, offset = 0x4, fixed_abs, tag = 'smem constant byte address 0x4 - core index']
  #allocation1 [shape = 'u32[144,128]{1,0:T(1,128)}', space=vmem, size = 0x12000, scoped, tag = 'internal scratch']
  %s0 = inlined_call_operand.hbm [shape: f32[16,784], index: 0, kind: input, shape index: {}]
  %s1 = inlined_call_operand.hbm [shape: bf16[784,256], index: 1, kind: input, shape index: {}]
  %s2 = inlined_call_operand.vmem [shape: f32[1,256], index: 2, kind: input, shape index: {}]
  %s3 = inlined_call_operand.hbm [shape: bf16[256,128], index: 3, kind: input, shape index: {}]
  %s4 = inlined_call_operand.vmem [shape: f32[1,128], index: 4, kind: input, shape index: {}]
  %s5 = inlined_call_operand.hbm [shape: bf16[128,128], index: 5, kind: input, shape index: {}]
  %s6 = inlined_call_operand.vmem [shape: f32[1,128], index: 6, kind: input, shape index: {}]
  %s7 = inlined_call_operand.hbm [shape: bf16[128,128], index: 7, kind: input, shape index: {}]
  %s8 = inlined_call_operand.vmem [shape: f32[1,128], index: 8, kind: input, shape index: {}]
  %s9 = inlined_call_operand.hbm [shape: bf16[128,128], index: 9, kind: input, shape index: {}]
  %s10 = inlined_call_operand.vmem [shape: f32[1,128], index: 10, kind: input, shape index: {}]
  %s11 = inlined_call_operand.hbm [shape: f32[16,128], index: 11, kind: output, shape index: {}]
  %s12 = sld [smem:[#allocation0]]
  $region78: #{mlp_forward.1} parent=0
    _
  %s14 = ssub.s32 1, %s12
  %s15 = scalar_select 0, %s14, %s12
  $region1: #{mlp_forward.1} parent=0
    #allocation2 [shape = 'u8[57344]{0}', space=vmem, size = 0xe000, scoped, tag = 'input window, operand 0, single buffered']
    #allocation3 [shape = 's32[1]{0}', space=sflag, size = 0x4, scoped, tag = 'scoped memory for mlp_forward.1']
    #allocation4 [shape = 's32[1]{0}', space=sflag, size = 0x4, scoped, tag = 'scoped memory for mlp_forward.1']
    #allocation5 [shape = 'u8[401408]{0}', space=vmem, size = 0x62000, scoped, tag = 'input window, operand 1, single buffered']
    #allocation6 [shape = 's32[1]{0}', space=sflag, size = 0x4, scoped, tag = 'scoped memory for mlp_forward.1']
    #allocation7 [shape = 'u8[65536]{0}', space=vmem, size = 0x10000, scoped, tag = 'input window, operand 3, single buffered']
    #allocation8 [shape = 'u8[32768]{0}', space=vmem, size = 0x8000, scoped, tag = 'input window, operand 5, single buffered']
    #allocation9 [shape = 's32[1]{0}', space=sflag, size = 0x4, scoped, tag = 'scoped memory for mlp_forward.1']
    #allocation10 [shape = 'u8[32768]{0}', space=vmem, size = 0x8000, scoped, tag = 'input window, operand 7, single buffered']
    #allocation11 [shape = 'u8[32768]{0}', space=vmem, size = 0x8000, scoped, tag = 'input window, operand 9, single buffered']
    #allocation12 [shape = 's32[1]{0}', space=sflag, size = 0x4, scoped, tag = 'scoped memory for mlp_forward.1']
    #allocation13 [shape = 'u8[8192]{0}', space=vmem, size = 0x2000, scoped, tag = 'output window, operand 0, single buffered']
    %16 = vsyncpa [#allocation3], 0
    %17 = vsyncpa [#allocation6], 0
    %18 = vsyncpa [#allocation9], 0
    %19 = vsyncpa [#allocation12], 0
    %20 = vsyncpa [#allocation4], 0
    // Predicated region
    $region2: #{mlp_forward.1} parent=1 // pred_check
      _
    $region3: #{mlp_forward.1} parent=1 // pred_check_branch
      %22 = sbr.rel (0) target = $region5
    $region4: #{mlp_forward.1} parent=1 // pred_region
      %s24 = ssub.s32 1792, 1792
      %25 = vsyncadd [#allocation3], %s24
      %s26 = sshll.u32 [#allocation2], 4
      %s27 = int_to_ptr.vmem [resolvable:$true] %s26
      %32 = dma.hbm_to_vmem [thread:$0]  %s0, 1792, %s27, [#allocation3], 896, 896, 56
    $region5: #{mlp_forward.1} parent=1 // pred_fallthru
      _
    // Predicated region
    $region6: #{mlp_forward.1} parent=1 // pred_check
      _
    $region7: #{mlp_forward.1} parent=1 // pred_check_branch
      %34 = sbr.rel (0) target = $region9
    $region8: #{mlp_forward.1} parent=1 // pred_region
      %s36 = ssub.s32 12544, 12544
      %37 = vsyncadd [#allocation6], %s36
      %s38 = sshll.u32 [#allocation5], 4
      %s39 = int_to_ptr.vmem [resolvable:$true] %s38
      %44 = dma.hbm_to_vmem [thread:$0]  %s1, 12544, %s39, [#allocation6], 128, 128, 8
    $region9: #{mlp_forward.1} parent=1 // pred_fallthru
      _
    // Predicated region
    $region10: #{mlp_forward.1} parent=1 // pred_check
      _
    $region11: #{mlp_forward.1} parent=1 // pred_check_branch
      %46 = sbr.rel (0) target = $region13
    $region12: #{mlp_forward.1} parent=1 // pred_region
      _
    $region13: #{mlp_forward.1} parent=1 // pred_fallthru
      _
    // Predicated region
    $region14: #{mlp_forward.1} parent=1 // pred_check
      _
    $region15: #{mlp_forward.1} parent=1 // pred_check_branch
      %48 = sbr.rel (0) target = $region17
    $region16: #{mlp_forward.1} parent=1 // pred_region
      %s50 = ssub.s32 2048, 2048
      %51 = vsyncadd [#allocation6], %s50
      %s52 = sshll.u32 [#allocation7], 4
      %s53 = int_to_ptr.vmem [resolvable:$true] %s52
      %58 = dma.hbm_to_vmem [thread:$0]  %s3, 2048, %s53, [#allocation6], 64, 64, 4
    $region17: #{mlp_forward.1} parent=1 // pred_fallthru
      _
    // Predicated region
    $region18: #{mlp_forward.1} parent=1 // pred_check
      _
    $region19: #{mlp_forward.1} parent=1 // pred_check_branch
      %60 = sbr.rel (0) target = $region21
    $region20: #{mlp_forward.1} parent=1 // pred_region
      _
    $region21: #{mlp_forward.1} parent=1 // pred_fallthru
      _
    // Predicated region
    $region22: #{mlp_forward.1} parent=1 // pred_check
      _
    $region23: #{mlp_forward.1} parent=1 // pred_check_branch
      %62 = sbr.rel (0) target = $region25
    $region24: #{mlp_forward.1} parent=1 // pred_region
      %s64 = ssub.s32 1024, 1024
      %65 = vsyncadd [#allocation9], %s64
      %s66 = sshll.u32 [#allocation8], 4
      %s67 = int_to_ptr.vmem [resolvable:$true] %s66
      %72 = dma.hbm_to_vmem [thread:$0]  %s5, 1024, %s67, [#allocation9], 64, 64, 4
    $region25: #{mlp_forward.1} parent=1 // pred_fallthru
      _
    // Predicated region
    $region26: #{mlp_forward.1} parent=1 // pred_check
      _
    $region27: #{mlp_forward.1} parent=1 // pred_check_branch
      %74 = sbr.rel (0) target = $region29
    $region28: #{mlp_forward.1} parent=1 // pred_region
      _
    $region29: #{mlp_forward.1} parent=1 // pred_fallthru
      _
    // Predicated region
    $region30: #{mlp_forward.1} parent=1 // pred_check
      _
    $region31: #{mlp_forward.1} parent=1 // pred_check_branch
      %76 = sbr.rel (0) target = $region33
    $region32: #{mlp_forward.1} parent=1 // pred_region
      %s78 = ssub.s32 1024, 1024
      %79 = vsyncadd [#allocation9], %s78
      %s80 = sshll.u32 [#allocation10], 4
      %s81 = int_to_ptr.vmem [resolvable:$true] %s80
      %86 = dma.hbm_to_vmem [thread:$0]  %s7, 1024, %s81, [#allocation9], 64, 64, 4
    $region33: #{mlp_forward.1} parent=1 // pred_fallthru
      _
    // Predicated region
    $region34: #{mlp_forward.1} parent=1 // pred_check
      _
    $region35: #{mlp_forward.1} parent=1 // pred_check_branch
      %88 = sbr.rel (0) target = $region37
    $region36: #{mlp_forward.1} parent=1 // pred_region
      _
    $region37: #{mlp_forward.1} parent=1 // pred_fallthru
      _
    // Predicated region
    $region38: #{mlp_forward.1} parent=1 // pred_check
      _
    $region39: #{mlp_forward.1} parent=1 // pred_check_branch
      %90 = sbr.rel (0) target = $region41
    $region40: #{mlp_forward.1} parent=1 // pred_region
      %s92 = ssub.s32 1024, 1024
      %93 = vsyncadd [#allocation12], %s92
      %s94 = sshll.u32 [#allocation11], 4
      %s95 = int_to_ptr.vmem [resolvable:$true] %s94
      %100 = dma.hbm_to_vmem [thread:$0]  %s9, 1024, %s95, [#allocation12], 64, 64, 4
    $region41: #{mlp_forward.1} parent=1 // pred_fallthru
      _
    // Predicated region
    $region42: #{mlp_forward.1} parent=1 // pred_check
      _
    $region43: #{mlp_forward.1} parent=1 // pred_check_branch
      %102 = sbr.rel (0) target = $region45
    $region44: #{mlp_forward.1} parent=1 // pred_region
      _
    $region45: #{mlp_forward.1} parent=1 // pred_fallthru
      _
    // Predicated region
    $region46: #{mlp_forward.1} parent=1 // pred_check
      _
    $region47: #{mlp_forward.1} parent=1 // pred_check_branch
      %104 = sbr.rel (0) target = $region49
    $region48: #{mlp_forward.1} parent=1 // pred_region
      %105 = dma.done [#allocation3], 1792
    $region49: #{mlp_forward.1} parent=1 // pred_fallthru
      _
    // Predicated region
    $region50: #{mlp_forward.1} parent=1 // pred_check
      _
    $region51: #{mlp_forward.1} parent=1 // pred_check_branch
      %107 = sbr.rel (0) target = $region53
    $region52: #{mlp_forward.1} parent=1 // pred_region
      %108 = dma.done [#allocation6], 12544
    $region53: #{mlp_forward.1} parent=1 // pred_fallthru
      _
    // Predicated region
    $region54: #{mlp_forward.1} parent=1 // pred_check
      _
    $region55: #{mlp_forward.1} parent=1 // pred_check_branch
      %110 = sbr.rel (0) target = $region57
    $region56: #{mlp_forward.1} parent=1 // pred_region
      %111 = dma.done [#allocation6], 2048
    $region57: #{mlp_forward.1} parent=1 // pred_fallthru
      _
    // Predicated region
    $region58: #{mlp_forward.1} parent=1 // pred_check
      _
    $region59: #{mlp_forward.1} parent=1 // pred_check_branch
      %113 = sbr.rel (0) target = $region61
    $region60: #{mlp_forward.1} parent=1 // pred_region
      %114 = dma.done [#allocation9], 1024
    $region61: #{mlp_forward.1} parent=1 // pred_fallthru
      _
    // Predicated region
    $region62: #{mlp_forward.1} parent=1 // pred_check
      _
    $region63: #{mlp_forward.1} parent=1 // pred_check_branch
      %116 = sbr.rel (0) target = $region65
    $region64: #{mlp_forward.1} parent=1 // pred_region
      %117 = dma.done [#allocation9], 1024
    $region65: #{mlp_forward.1} parent=1 // pred_fallthru
      _
    // Predicated region
    $region66: #{mlp_forward.1} parent=1 // pred_check
      _
    $region67: #{mlp_forward.1} parent=1 // pred_check_branch
      %119 = sbr.rel (0) target = $region69
    $region68: #{mlp_forward.1} parent=1 // pred_region
      %120 = dma.done [#allocation12], 1024
    $region69: #{mlp_forward.1} parent=1 // pred_fallthru
      _
    %v122 = vld [vmem:[#allocation2] sm:$0xff]
    %v123 = vld [vmem:[#allocation2 + $0x8] sm:$0xff]
    %v124 = vld [vmem:[#allocation2 + $0x10] sm:$0xff]
    %v125 = vld [vmem:[#allocation2 + $0x18] sm:$0xff]
    %v126 = vld [vmem:[#allocation2 + $0x20] sm:$0xff]
    %v127 = vld [vmem:[#allocation2 + $0x28] sm:$0xff]
    %v128 = vld [vmem:[#allocation2 + $0x30] sm:$0xff]
    %v129 = vld [vmem:[#allocation2 + $0x38] sm:$0xff]
    %v130 = vld [vmem:[#allocation2 + $0x40] sm:$0xff]
    %v131 = vld [vmem:[#allocation2 + $0x48] sm:$0xff]
    %v132 = vld [vmem:[#allocation2 + $0x50] sm:$0xff]
    %v133 = vld [vmem:[#allocation2 + $0x58] sm:$0xff]
    %v134 = vld [vmem:[#allocation2 + $0x60] sm:$0xff]
    %v135 = vld [vmem:[#allocation2 + $0x68] sm:$0xff]
    %v136 = vpack.c.bf16 %v129, %v122
    %v137 = vpack.c.bf16 %v130, %v123
    %v138 = vpack.c.bf16 %v131, %v124
    %v139 = vpack.c.bf16 %v132, %v125
    %v140 = vpack.c.bf16 %v133, %v126
    %v141 = vpack.c.bf16 %v134, %v127
    %v142 = vpack.c.bf16 %v135, %v128
    %v143 = vld [vmem:[#allocation5] sm:$0xff]
    %v144 = vld [vmem:[#allocation5 + $0x8] sm:$0xff]
    %v145 = vld [vmem:[#allocation5 + $0x10] sm:$0xff]
    %v146 = vld [vmem:[#allocation5 + $0x18] sm:$0xff]
    %v147 = vld [vmem:[#allocation5 + $0x20] sm:$0xff]
    %v148 = vld [vmem:[#allocation5 + $0x28] sm:$0xff]
    %v149 = vld [vmem:[#allocation5 + $0x30] sm:$0xff]
    %v150 = vld [vmem:[#allocation5 + $0x38] sm:$0xff]
    %v151 = vld [vmem:[#allocation5 + $0x40] sm:$0xff]
    %v152 = vld [vmem:[#allocation5 + $0x48] sm:$0xff]
    %v153 = vld [vmem:[#allocation5 + $0x50] sm:$0xff]
    %v154 = vld [vmem:[#allocation5 + $0x58] sm:$0xff]
    %v155 = vld [vmem:[#allocation5 + $0x60] sm:$0xff]
    %v156 = vld [vmem:[#allocation5 + $0x68] sm:$0xff]
    %v157 = vld [vmem:[#allocation5 + $0x70] sm:$0xff]
    %v158 = vld [vmem:[#allocation5 + $0x78] sm:$0xff]
    %v159 = vld [vmem:[#allocation5 + $0x80] sm:$0xff]
    %v160 = vld [vmem:[#allocation5 + $0x88] sm:$0xff]
    %v161 = vld [vmem:[#allocation5 + $0x90] sm:$0xff]
    %v162 = vld [vmem:[#allocation5 + $0x98] sm:$0xff]
    %v163 = vld [vmem:[#allocation5 + $0xa0] sm:$0xff]
    %v164 = vld [vmem:[#allocation5 + $0xa8] sm:$0xff]
    %v165 = vld [vmem:[#allocation5 + $0xb0] sm:$0xff]
    %v166 = vld [vmem:[#allocation5 + $0xb8] sm:$0xff]
    %v167 = vld [vmem:[#allocation5 + $0xc0] sm:$0xff]
    %v168 = vld [vmem:[#allocation5 + $0xc8] sm:$0xff]
    %v169 = vld [vmem:[#allocation5 + $0xd0] sm:$0xff]
    %v170 = vld [vmem:[#allocation5 + $0xd8] sm:$0xff]
    %v171 = vld [vmem:[#allocation5 + $0xe0] sm:$0xff]
    %v172 = vld [vmem:[#allocation5 + $0xe8] sm:$0xff]
    %v173 = vld [vmem:[#allocation5 + $0xf0] sm:$0xff]
    %v174 = vld [vmem:[#allocation5 + $0xf8] sm:$0xff]
    %v175 = vld [vmem:[#allocation5 + $0x100] sm:$0xff]
    %v176 = vld [vmem:[#allocation5 + $0x108] sm:$0xff]
    %v177 = vld [vmem:[#allocation5 + $0x110] sm:$0xff]
    %v178 = vld [vmem:[#allocation5 + $0x118] sm:$0xff]
    %v179 = vld [vmem:[#allocation5 + $0x120] sm:$0xff]
    %v180 = vld [vmem:[#allocation5 + $0x128] sm:$0xff]
    %v181 = vld [vmem:[#allocation5 + $0x130] sm:$0xff]
    %v182 = vld [vmem:[#allocation5 + $0x138] sm:$0xff]
    %v183 = vld [vmem:[#allocation5 + $0x140] sm:$0xff]
    %v184 = vld [vmem:[#allocation5 + $0x148] sm:$0xff]
    %v185 = vld [vmem:[#allocation5 + $0x150] sm:$0xff]
    %v186 = vld [vmem:[#allocation5 + $0x158] sm:$0xff]
    %v187 = vld [vmem:[#allocation5 + $0x160] sm:$0xff]
    %v188 = vld [vmem:[#allocation5 + $0x168] sm:$0xff]
    %v189 = vld [vmem:[#allocation5 + $0x170] sm:$0xff]
    %v190 = vld [vmem:[#allocation5 + $0x178] sm:$0xff]
    %v191 = vld [vmem:[#allocation5 + $0x180] sm:$0xff]
    %v192 = vld [vmem:[#allocation5 + $0x188] sm:$0xff]
    %v193 = vld [vmem:[#allocation5 + $0x190] sm:$0xff]
    %v194 = vld [vmem:[#allocation5 + $0x198] sm:$0xff]
    %v195 = vld [vmem:[#allocation5 + $0x1a0] sm:$0xff]
    %v196 = vld [vmem:[#allocation5 + $0x1a8] sm:$0xff]
    %v197 = vld [vmem:[#allocation5 + $0x1b0] sm:$0xff]
    %v198 = vld [vmem:[#allocation5 + $0x1b8] sm:$0xff]
    %v199 = vld [vmem:[#allocation5 + $0x1c0] sm:$0xff]
    %v200 = vld [vmem:[#allocation5 + $0x1c8] sm:$0xff]
    %v201 = vld [vmem:[#allocation5 + $0x1d0] sm:$0xff]
    %v202 = vld [vmem:[#allocation5 + $0x1d8] sm:$0xff]
    %v203 = vld [vmem:[#allocation5 + $0x1e0] sm:$0xff]
    %v204 = vld [vmem:[#allocation5 + $0x1e8] sm:$0xff]
    %v205 = vld [vmem:[#allocation5 + $0x1f0] sm:$0xff]
    %v206 = vld [vmem:[#allocation5 + $0x1f8] sm:$0xff]
    %v207 = vld [vmem:[#allocation5 + $0x200] sm:$0xff]
    %v208 = vld [vmem:[#allocation5 + $0x208] sm:$0xff]
    %v209 = vld [vmem:[#allocation5 + $0x210] sm:$0xff]
    %v210 = vld [vmem:[#allocation5 + $0x218] sm:$0xff]
    %v211 = vld [vmem:[#allocation5 + $0x220] sm:$0xff]
    %v212 = vld [vmem:[#allocation5 + $0x228] sm:$0xff]
    %v213 = vld [vmem:[#allocation5 + $0x230] sm:$0xff]
    %v214 = vld [vmem:[#allocation5 + $0x238] sm:$0xff]
    %v215 = vld [vmem:[#allocation5 + $0x240] sm:$0xff]
    %v216 = vld [vmem:[#allocation5 + $0x248] sm:$0xff]
    %v217 = vld [vmem:[#allocation5 + $0x250] sm:$0xff]
    %v218 = vld [vmem:[#allocation5 + $0x258] sm:$0xff]
    %v219 = vld [vmem:[#allocation5 + $0x260] sm:$0xff]
    %v220 = vld [vmem:[#allocation5 + $0x268] sm:$0xff]
    %v221 = vld [vmem:[#allocation5 + $0x270] sm:$0xff]
    %v222 = vld [vmem:[#allocation5 + $0x278] sm:$0xff]
    %v223 = vld [vmem:[#allocation5 + $0x280] sm:$0xff]
    %v224 = vld [vmem:[#allocation5 + $0x288] sm:$0xff]
    %v225 = vld [vmem:[#allocation5 + $0x290] sm:$0xff]
    %v226 = vld [vmem:[#allocation5 + $0x298] sm:$0xff]
    %v227 = vld [vmem:[#allocation5 + $0x2a0] sm:$0xff]
    %v228 = vld [vmem:[#allocation5 + $0x2a8] sm:$0xff]
    %v229 = vld [vmem:[#allocation5 + $0x2b0] sm:$0xff]
    %v230 = vld [vmem:[#allocation5 + $0x2b8] sm:$0xff]
    %v231 = vld [vmem:[#allocation5 + $0x2c0] sm:$0xff]
    %v232 = vld [vmem:[#allocation5 + $0x2c8] sm:$0xff]
    %v233 = vld [vmem:[#allocation5 + $0x2d0] sm:$0xff]
    %v234 = vld [vmem:[#allocation5 + $0x2d8] sm:$0xff]
    %v235 = vld [vmem:[#allocation5 + $0x2e0] sm:$0xff]
    %v236 = vld [vmem:[#allocation5 + $0x2e8] sm:$0xff]
    %v237 = vld [vmem:[#allocation5 + $0x2f0] sm:$0xff]
    %v238 = vld [vmem:[#allocation5 + $0x2f8] sm:$0xff]
    %v239 = vld [vmem:[#allocation5 + $0x300] sm:$0xff]
    %v240 = vld [vmem:[#allocation5 + $0x308] sm:$0xff]
    %v241 = vld [vmem:[%s2] sm:$0x3]
    %v243 = vlaneseq
    %v244 = vshrl.u32 %v243, 7
    %v245 = vsub.s32 0, %v244
    %v246 = vrot.slane %v241, %v245
    %v247 = vlaneseq
    %v248 = vshrl.u32 %v247, 7
    %v249 = vsub.s32 1, %v248
    %v250 = vrot.slane %v241, %v249
    %v351 = vunpack.c.l.b16 %v143
    %v352 = vunpack.c.h.b16 %v143
    %v353 = vunpack.c.l.b16 %v144
    %v354 = vunpack.c.h.b16 %v144
    %v355 = vunpack.c.l.b16 %v145
    %v356 = vunpack.c.h.b16 %v145
    %v357 = vunpack.c.l.b16 %v146
    %v358 = vunpack.c.h.b16 %v146
    %v359 = vunpack.c.l.b16 %v147
    %v360 = vunpack.c.h.b16 %v147
    %v361 = vunpack.c.l.b16 %v148
    %v362 = vunpack.c.h.b16 %v148
    %v363 = vunpack.c.l.b16 %v149
    %v364 = vunpack.c.h.b16 %v149
    %v365 = vunpack.c.l.b16 %v150
    %v366 = vunpack.c.h.b16 %v150
    %v367 = vunpack.c.l.b16 %v151
    %v368 = vunpack.c.h.b16 %v151
    %v369 = vunpack.c.l.b16 %v152
    %v370 = vunpack.c.h.b16 %v152
    %v371 = vunpack.c.l.b16 %v153
    %v372 = vunpack.c.h.b16 %v153
    %v373 = vunpack.c.l.b16 %v154
    %v374 = vunpack.c.h.b16 %v154
    %v375 = vunpack.c.l.b16 %v155
    %v376 = vunpack.c.h.b16 %v155
    %v377 = vunpack.c.l.b16 %v156
    %v378 = vunpack.c.h.b16 %v156
    %v379 = vunpack.c.l.b16 %v157
    %v380 = vunpack.c.h.b16 %v157
    %v381 = vunpack.c.l.b16 %v158
    %v382 = vunpack.c.h.b16 %v158
    %v383 = vunpack.c.l.b16 %v159
    %v384 = vunpack.c.h.b16 %v159
    %v385 = vunpack.c.l.b16 %v160
    %v386 = vunpack.c.h.b16 %v160
    %v387 = vunpack.c.l.b16 %v161
    %v388 = vunpack.c.h.b16 %v161
    %v389 = vunpack.c.l.b16 %v162
    %v390 = vunpack.c.h.b16 %v162
    %v391 = vunpack.c.l.b16 %v163
    %v392 = vunpack.c.h.b16 %v163
    %v393 = vunpack.c.l.b16 %v164
    %v394 = vunpack.c.h.b16 %v164
    %v395 = vunpack.c.l.b16 %v165
    %v396 = vunpack.c.h.b16 %v165
    %v397 = vunpack.c.l.b16 %v166
    %v398 = vunpack.c.h.b16 %v166
    %v399 = vunpack.c.l.b16 %v167
    %v400 = vunpack.c.h.b16 %v167
    %v401 = vunpack.c.l.b16 %v168
    %v402 = vunpack.c.h.b16 %v168
    %v403 = vunpack.c.l.b16 %v169
    %v404 = vunpack.c.h.b16 %v169
    %v405 = vunpack.c.l.b16 %v170
    %v406 = vunpack.c.h.b16 %v170
    %v407 = vunpack.c.l.b16 %v171
    %v408 = vunpack.c.h.b16 %v171
    %v409 = vunpack.c.l.b16 %v172
    %v410 = vunpack.c.h.b16 %v172
    %v411 = vunpack.c.l.b16 %v173
    %v412 = vunpack.c.h.b16 %v173
    %v413 = vunpack.c.l.b16 %v174
    %v414 = vunpack.c.h.b16 %v174
    %v415 = vunpack.c.l.b16 %v175
    %v416 = vunpack.c.h.b16 %v175
    %v417 = vunpack.c.l.b16 %v176
    %v418 = vunpack.c.h.b16 %v176
    %v419 = vunpack.c.l.b16 %v177
    %v420 = vunpack.c.h.b16 %v177
    %v421 = vunpack.c.l.b16 %v178
    %v422 = vunpack.c.h.b16 %v178
    %v423 = vunpack.c.l.b16 %v179
    %v424 = vunpack.c.h.b16 %v179
    %v425 = vunpack.c.l.b16 %v180
    %v426 = vunpack.c.h.b16 %v180
    %v427 = vunpack.c.l.b16 %v181
    %v428 = vunpack.c.h.b16 %v181
    %v429 = vunpack.c.l.b16 %v182
    %v430 = vunpack.c.h.b16 %v182
    %v431 = vunpack.c.l.b16 %v183
    %v432 = vunpack.c.h.b16 %v183
    %v433 = vunpack.c.l.b16 %v184
    %v434 = vunpack.c.h.b16 %v184
    %v435 = vunpack.c.l.b16 %v185
    %v436 = vunpack.c.h.b16 %v185
    %v437 = vunpack.c.l.b16 %v186
    %v438 = vunpack.c.h.b16 %v186
    %v439 = vunpack.c.l.b16 %v187
    %v440 = vunpack.c.h.b16 %v187
    %v441 = vunpack.c.l.b16 %v188
    %v442 = vunpack.c.h.b16 %v188
    %v443 = vunpack.c.l.b16 %v189
    %v444 = vunpack.c.h.b16 %v189
    %v445 = vunpack.c.l.b16 %v190
    %v446 = vunpack.c.h.b16 %v190
    %v447 = vunpack.c.l.b16 %v191
    %v448 = vunpack.c.h.b16 %v191
    %v449 = vunpack.c.l.b16 %v192
    %v450 = vunpack.c.h.b16 %v192
    %v451 = vunpack.c.l.b16 %v193
    %v452 = vunpack.c.h.b16 %v193
    %v453 = vunpack.c.l.b16 %v194
    %v454 = vunpack.c.h.b16 %v194
    %v455 = vunpack.c.l.b16 %v195
    %v456 = vunpack.c.h.b16 %v195
    %v457 = vunpack.c.l.b16 %v196
    %v458 = vunpack.c.h.b16 %v196
    %v459 = vunpack.c.l.b16 %v197
    %v460 = vunpack.c.h.b16 %v197
    %v461 = vunpack.c.l.b16 %v198
    %v462 = vunpack.c.h.b16 %v198
    %v463 = vunpack.c.l.b16 %v199
    %v464 = vunpack.c.h.b16 %v199
    %v465 = vunpack.c.l.b16 %v200
    %v466 = vunpack.c.h.b16 %v200
    %v467 = vunpack.c.l.b16 %v201
    %v468 = vunpack.c.h.b16 %v201
    %v469 = vunpack.c.l.b16 %v202
    %v470 = vunpack.c.h.b16 %v202
    %v471 = vunpack.c.l.b16 %v203
    %v472 = vunpack.c.h.b16 %v203
    %v473 = vunpack.c.l.b16 %v204
    %v474 = vunpack.c.h.b16 %v204
    %v475 = vunpack.c.l.b16 %v205
    %v476 = vunpack.c.h.b16 %v205
    %v477 = vunpack.c.l.b16 %v206
    %v478 = vunpack.c.h.b16 %v206
    %v479 = vunpack.c.l.b16 %v207
    %v480 = vunpack.c.h.b16 %v207
    %v481 = vunpack.c.l.b16 %v208
    %v482 = vunpack.c.h.b16 %v208
    %v483 = vunpack.c.l.b16 %v209
    %v484 = vunpack.c.h.b16 %v209
    %v485 = vunpack.c.l.b16 %v210
    %v486 = vunpack.c.h.b16 %v210
    %v487 = vunpack.c.l.b16 %v211
    %v488 = vunpack.c.h.b16 %v211
    %v489 = vunpack.c.l.b16 %v212
    %v490 = vunpack.c.h.b16 %v212
    %v491 = vunpack.c.l.b16 %v213
    %v492 = vunpack.c.h.b16 %v213
    %v493 = vunpack.c.l.b16 %v214
    %v494 = vunpack.c.h.b16 %v214
    %v495 = vunpack.c.l.b16 %v215
    %v496 = vunpack.c.h.b16 %v215
    %v497 = vunpack.c.l.b16 %v216
    %v498 = vunpack.c.h.b16 %v216
    %v499 = vunpack.c.l.b16 %v217
    %v500 = vunpack.c.h.b16 %v217
    %v501 = vunpack.c.l.b16 %v218
    %v502 = vunpack.c.h.b16 %v218
    %v503 = vunpack.c.l.b16 %v219
    %v504 = vunpack.c.h.b16 %v219
    %v505 = vunpack.c.l.b16 %v220
    %v506 = vunpack.c.h.b16 %v220
    %v507 = vunpack.c.l.b16 %v221
    %v508 = vunpack.c.h.b16 %v221
    %v509 = vunpack.c.l.b16 %v222
    %v510 = vunpack.c.h.b16 %v222
    %v511 = vunpack.c.l.b16 %v223
    %v512 = vunpack.c.h.b16 %v223
    %v513 = vunpack.c.l.b16 %v224
    %v514 = vunpack.c.h.b16 %v224
    %v515 = vunpack.c.l.b16 %v225
    %v516 = vunpack.c.h.b16 %v225
    %v517 = vunpack.c.l.b16 %v226
    %v518 = vunpack.c.h.b16 %v226
    %v519 = vunpack.c.l.b16 %v227
    %v520 = vunpack.c.h.b16 %v227
    %v521 = vunpack.c.l.b16 %v228
    %v522 = vunpack.c.h.b16 %v228
    %v523 = vunpack.c.l.b16 %v229
    %v524 = vunpack.c.h.b16 %v229
    %v525 = vunpack.c.l.b16 %v230
    %v526 = vunpack.c.h.b16 %v230
    %v527 = vunpack.c.l.b16 %v231
    %v528 = vunpack.c.h.b16 %v231
    %v529 = vunpack.c.l.b16 %v232
    %v530 = vunpack.c.h.b16 %v232
    %v531 = vunpack.c.l.b16 %v233
    %v532 = vunpack.c.h.b16 %v233
    %v533 = vunpack.c.l.b16 %v234
    %v534 = vunpack.c.h.b16 %v234
    %v535 = vunpack.c.l.b16 %v235
    %v536 = vunpack.c.h.b16 %v235
    %v537 = vunpack.c.l.b16 %v236
    %v538 = vunpack.c.h.b16 %v236
    %v539 = vunpack.c.l.b16 %v237
    %v540 = vunpack.c.h.b16 %v237
    %v541 = vunpack.c.l.b16 %v238
    %v542 = vunpack.c.h.b16 %v238
    %v543 = vunpack.c.l.b16 %v239
    %v544 = vunpack.c.h.b16 %v239
    %v545 = vunpack.c.l.b16 %v240
    %v546 = vunpack.c.h.b16 %v240
    %v547 = vpack.c.b16 %v353, %v351
    %v548 = vpack.c.b16 %v354, %v352
    %v549 = vpack.c.b16 %v357, %v355
    %v550 = vpack.c.b16 %v358, %v356
    %v551 = vpack.c.b16 %v361, %v359
    %v552 = vpack.c.b16 %v362, %v360
    %v553 = vpack.c.b16 %v365, %v363
    %v554 = vpack.c.b16 %v366, %v364
    %v555 = vpack.c.b16 %v369, %v367
    %v556 = vpack.c.b16 %v370, %v368
    %v557 = vpack.c.b16 %v373, %v371
    %v558 = vpack.c.b16 %v374, %v372
    %v559 = vpack.c.b16 %v377, %v375
    %v560 = vpack.c.b16 %v378, %v376
    %v561 = vpack.c.b16 %v381, %v379
    %v562 = vpack.c.b16 %v382, %v380
    %v563 = vpack.c.b16 %v385, %v383
    %v564 = vpack.c.b16 %v386, %v384
    %v565 = vpack.c.b16 %v389, %v387
    %v566 = vpack.c.b16 %v390, %v388
    %v567 = vpack.c.b16 %v393, %v391
    %v568 = vpack.c.b16 %v394, %v392
    %v569 = vpack.c.b16 %v397, %v395
    %v570 = vpack.c.b16 %v398, %v396
    %v571 = vpack.c.b16 %v401, %v399
    %v572 = vpack.c.b16 %v402, %v400
    %v573 = vpack.c.b16 %v405, %v403
    %v574 = vpack.c.b16 %v406, %v404
    %v575 = vpack.c.b16 %v409, %v407
    %v576 = vpack.c.b16 %v410, %v408
    %v577 = vpack.c.b16 %v413, %v411
    %v578 = vpack.c.b16 %v414, %v412
    %v579 = vpack.c.b16 %v417, %v415
    %v580 = vpack.c.b16 %v418, %v416
    %v581 = vpack.c.b16 %v421, %v419
    %v582 = vpack.c.b16 %v422, %v420
    %v583 = vpack.c.b16 %v425, %v423
    %v584 = vpack.c.b16 %v426, %v424
    %v585 = vpack.c.b16 %v429, %v427
    %v586 = vpack.c.b16 %v430, %v428
    %v587 = vpack.c.b16 %v433, %v431
    %v588 = vpack.c.b16 %v434, %v432
    %v589 = vpack.c.b16 %v437, %v435
    %v590 = vpack.c.b16 %v438, %v436
    %v591 = vpack.c.b16 %v441, %v439
    %v592 = vpack.c.b16 %v442, %v440
    %v593 = vpack.c.b16 %v445, %v443
    %v594 = vpack.c.b16 %v446, %v444
    %v595 = vpack.c.b16 %v449, %v447
    %v596 = vpack.c.b16 %v450, %v448
    %v597 = vpack.c.b16 %v453, %v451
    %v598 = vpack.c.b16 %v454, %v452
    %v599 = vpack.c.b16 %v457, %v455
    %v600 = vpack.c.b16 %v458, %v456
    %v601 = vpack.c.b16 %v461, %v459
    %v602 = vpack.c.b16 %v462, %v460
    %v603 = vpack.c.b16 %v465, %v463
    %v604 = vpack.c.b16 %v466, %v464
    %v605 = vpack.c.b16 %v469, %v467
    %v606 = vpack.c.b16 %v470, %v468
    %v607 = vpack.c.b16 %v473, %v471
    %v608 = vpack.c.b16 %v474, %v472
    %v609 = vpack.c.b16 %v477, %v475
    %v610 = vpack.c.b16 %v478, %v476
    %v611 = vpack.c.b16 %v481, %v479
    %v612 = vpack.c.b16 %v482, %v480
    %v613 = vpack.c.b16 %v485, %v483
    %v614 = vpack.c.b16 %v486, %v484
    %v615 = vpack.c.b16 %v489, %v487
    %v616 = vpack.c.b16 %v490, %v488
    %v617 = vpack.c.b16 %v493, %v491
    %v618 = vpack.c.b16 %v494, %v492
    %v619 = vpack.c.b16 %v497, %v495
    %v620 = vpack.c.b16 %v498, %v496
    %v621 = vpack.c.b16 %v501, %v499
    %v622 = vpack.c.b16 %v502, %v500
    %v623 = vpack.c.b16 %v505, %v503
    %v624 = vpack.c.b16 %v506, %v504
    %v625 = vpack.c.b16 %v509, %v507
    %v626 = vpack.c.b16 %v510, %v508
    %v627 = vpack.c.b16 %v513, %v511
    %v628 = vpack.c.b16 %v514, %v512
    %v629 = vpack.c.b16 %v517, %v515
    %v630 = vpack.c.b16 %v518, %v516
    %v631 = vpack.c.b16 %v521, %v519
    %v632 = vpack.c.b16 %v522, %v520
    %v633 = vpack.c.b16 %v525, %v523
    %v634 = vpack.c.b16 %v526, %v524
    %v635 = vpack.c.b16 %v529, %v527
    %v636 = vpack.c.b16 %v530, %v528
    %v637 = vpack.c.b16 %v533, %v531
    %v638 = vpack.c.b16 %v534, %v532
    %v639 = vpack.c.b16 %v537, %v535
    %v640 = vpack.c.b16 %v538, %v536
    %v641 = vpack.c.b16 %v541, %v539
    %v642 = vpack.c.b16 %v542, %v540
    %v643 = vpack.c.b16 %v545, %v543
    %v644 = vpack.c.b16 %v546, %v544
    %vm743 = vcmask 130048
    %v745 = vsel %vm743, %v142, 0
    %747 = vmatprep.subr.bf16.mxu0 %v562
    %748 = vmatpush1.bf16.msra.mxu0 %v561
    %749 = vmatprep.subr.bf16.mxu0 %v560
    %750 = vmatpush1.bf16.msra.mxu0 %v559
    %751 = vmatprep.subr.bf16.mxu0 %v558
    %752 = vmatpush1.bf16.msra.mxu0 %v557
    %753 = vmatprep.subr.bf16.mxu0 %v556
    %754 = vmatpush1.bf16.msra.mxu0 %v555
    %755 = vmatprep.subr.bf16.mxu0 %v554
    %756 = vmatpush1.bf16.msra.mxu0 %v553
    %757 = vmatprep.subr.bf16.mxu0 %v552
    %758 = vmatpush1.bf16.msra.mxu0 %v551
    %759 = vmatprep.subr.bf16.mxu0 %v550
    %760 = vmatpush1.bf16.msra.mxu0 %v549
    %761 = vmatprep.subr.bf16.mxu0 %v548
    %762 = vmatpush1.bf16.msra.mxu0 %v547
    %763 = vmatprep.subr.bf16.mxu0 %v578
    %764 = vmatpush2.bf16.msra.mxu0 %v577
    %765 = vmatprep.subr.bf16.mxu0 %v576
    %766 = vmatpush2.bf16.msra.mxu0 %v575
    %767 = vmatprep.subr.bf16.mxu0 %v574
    %768 = vmatpush2.bf16.msra.mxu0 %v573
    %769 = vmatprep.subr.bf16.mxu0 %v572
    %770 = vmatpush2.bf16.msra.mxu0 %v571
    %771 = vmatprep.subr.bf16.mxu0 %v570
    %772 = vmatpush2.bf16.msra.mxu0 %v569
    %773 = vmatprep.subr.bf16.mxu0 %v568
    %774 = vmatpush2.bf16.msra.mxu0 %v567
    %775 = vmatprep.subr.bf16.mxu0 %v566
    %776 = vmatpush2.bf16.msra.mxu0 %v565
    %777 = vmatprep.subr.bf16.mxu0 %v564
    %778 = vmatpush2.bf16.msra.mxu0 %v563
    %779 = vmatprep.mubr.bf16.mxu0 %v137
    %780 = vmatmul.mubr.bf16.gmra.mxu0 %v136
    %v781 = vpop.f32.mrf.mxu0
    %v782 = vadd.f32 %v246, %v781
    %v783 = vpop.f32.mrf.mxu0
    %v784 = vadd.f32 %v250, %v783
    %v785 = vpop.f32.mrf.mxu0
    %v786 = vadd.f32 %v246, %v785
    %v787 = vpop.f32.mrf.mxu0
    %v788 = vadd.f32 %v250, %v787
    %789 = vdwg.mxu0
    %790 = vmatprep.subr.bf16.mxu0 %v594
    %791 = vmatpush1.bf16.msra.mxu0 %v593
    %792 = vmatprep.subr.bf16.mxu0 %v592
    %793 = vmatpush1.bf16.msra.mxu0 %v591
    %794 = vmatprep.subr.bf16.mxu0 %v590
    %795 = vmatpush1.bf16.msra.mxu0 %v589
    %796 = vmatprep.subr.bf16.mxu0 %v588
    %797 = vmatpush1.bf16.msra.mxu0 %v587
    %798 = vmatprep.subr.bf16.mxu0 %v586
    %799 = vmatpush1.bf16.msra.mxu0 %v585
    %800 = vmatprep.subr.bf16.mxu0 %v584
    %801 = vmatpush1.bf16.msra.mxu0 %v583
    %802 = vmatprep.subr.bf16.mxu0 %v582
    %803 = vmatpush1.bf16.msra.mxu0 %v581
    %804 = vmatprep.subr.bf16.mxu0 %v580
    %805 = vmatpush1.bf16.msra.mxu0 %v579
    %806 = vmatprep.subr.bf16.mxu0 %v610
    %807 = vmatpush2.bf16.msra.mxu0 %v609
    %808 = vmatprep.subr.bf16.mxu0 %v608
    %809 = vmatpush2.bf16.msra.mxu0 %v607
    %810 = vmatprep.subr.bf16.mxu0 %v606
    %811 = vmatpush2.bf16.msra.mxu0 %v605
    %812 = vmatprep.subr.bf16.mxu0 %v604
    %813 = vmatpush2.bf16.msra.mxu0 %v603
    %814 = vmatprep.subr.bf16.mxu0 %v602
    %815 = vmatpush2.bf16.msra.mxu0 %v601
    %816 = vmatprep.subr.bf16.mxu0 %v600
    %817 = vmatpush2.bf16.msra.mxu0 %v599
    %818 = vmatprep.subr.bf16.mxu0 %v598
    %819 = vmatpush2.bf16.msra.mxu0 %v597
    %820 = vmatprep.subr.bf16.mxu0 %v596
    %821 = vmatpush2.bf16.msra.mxu0 %v595
    %822 = vmatprep.mubr.bf16.mxu0 %v139
    %823 = vmatmul.mubr.bf16.gmra.mxu0 %v138
    %v824 = vpop.f32.mrf.mxu0
    %v825 = vadd.f32 %v782, %v824
    %v826 = vpop.f32.mrf.mxu0
    %v827 = vadd.f32 %v784, %v826
    %v828 = vpop.f32.mrf.mxu0
    %v829 = vadd.f32 %v786, %v828
    %v830 = vpop.f32.mrf.mxu0
    %v831 = vadd.f32 %v788, %v830
    %832 = vdwg.mxu0
    %833 = vmatprep.subr.bf16.mxu0 %v626
    %834 = vmatpush1.bf16.msra.mxu0 %v625
    %835 = vmatprep.subr.bf16.mxu0 %v624
    %836 = vmatpush1.bf16.msra.mxu0 %v623
    %837 = vmatprep.subr.bf16.mxu0 %v622
    %838 = vmatpush1.bf16.msra.mxu0 %v621
    %839 = vmatprep.subr.bf16.mxu0 %v620
    %840 = vmatpush1.bf16.msra.mxu0 %v619
    %841 = vmatprep.subr.bf16.mxu0 %v618
    %842 = vmatpush1.bf16.msra.mxu0 %v617
    %843 = vmatprep.subr.bf16.mxu0 %v616
    %844 = vmatpush1.bf16.msra.mxu0 %v615
    %845 = vmatprep.subr.bf16.mxu0 %v614
    %846 = vmatpush1.bf16.msra.mxu0 %v613
    %847 = vmatprep.subr.bf16.mxu0 %v612
    %848 = vmatpush1.bf16.msra.mxu0 %v611
    %849 = vmatprep.subr.bf16.mxu0 %v642
    %850 = vmatpush2.bf16.msra.mxu0 %v641
    %851 = vmatprep.subr.bf16.mxu0 %v640
    %852 = vmatpush2.bf16.msra.mxu0 %v639
    %853 = vmatprep.subr.bf16.mxu0 %v638
    %854 = vmatpush2.bf16.msra.mxu0 %v637
    %855 = vmatprep.subr.bf16.mxu0 %v636
    %856 = vmatpush2.bf16.msra.mxu0 %v635
    %857 = vmatprep.subr.bf16.mxu0 %v634
    %858 = vmatpush2.bf16.msra.mxu0 %v633
    %859 = vmatprep.subr.bf16.mxu0 %v632
    %860 = vmatpush2.bf16.msra.mxu0 %v631
    %861 = vmatprep.subr.bf16.mxu0 %v630
    %862 = vmatpush2.bf16.msra.mxu0 %v629
    %863 = vmatprep.subr.bf16.mxu0 %v628
    %864 = vmatpush2.bf16.msra.mxu0 %v627
    %865 = vmatprep.mubr.bf16.mxu0 %v141
    %866 = vmatmul.mubr.bf16.gmra.mxu0 %v140
    %v867 = vpop.f32.mrf.mxu0
    %v868 = vadd.f32 %v825, %v867
    %v869 = vpop.f32.mrf.mxu0
    %v870 = vadd.f32 %v827, %v869
    %v871 = vpop.f32.mrf.mxu0
    %v872 = vadd.f32 %v829, %v871
    %v873 = vpop.f32.mrf.mxu0
    %v874 = vadd.f32 %v831, %v873
    %875 = vdwg.mxu0
    %876 = vmatprep.subr.bf16.mxu0 0
    %877 = vmatpush1.bf16.msra.mxu0 0
    %878 = vmatprep.subr.bf16.mxu0 0
    %879 = vmatpush1.bf16.msra.mxu0 0
    %880 = vmatprep.subr.bf16.mxu0 0
    %881 = vmatpush1.bf16.msra.mxu0 0
    %882 = vmatprep.subr.bf16.mxu0 0
    %883 = vmatpush1.bf16.msra.mxu0 0
    %884 = vmatprep.subr.bf16.mxu0 0
    %885 = vmatpush1.bf16.msra.mxu0 0
    %886 = vmatprep.subr.bf16.mxu0 0
    %887 = vmatpush1.bf16.msra.mxu0 0
    %888 = vmatprep.subr.bf16.mxu0 0
    %889 = vmatpush1.bf16.msra.mxu0 0
    %890 = vmatprep.subr.bf16.mxu0 %v644
    %891 = vmatpush1.bf16.msra.mxu0 %v643
    %892 = vmatprep.subr.bf16.mxu0 0
    %893 = vmatpush2.bf16.msra.mxu0 0
    %894 = vmatprep.subr.bf16.mxu0 0
    %895 = vmatpush2.bf16.msra.mxu0 0
    %896 = vmatprep.subr.bf16.mxu0 0
    %897 = vmatpush2.bf16.msra.mxu0 0
    %898 = vmatprep.subr.bf16.mxu0 0
    %899 = vmatpush2.bf16.msra.mxu0 0
    %900 = vmatprep.subr.bf16.mxu0 0
    %901 = vmatpush2.bf16.msra.mxu0 0
    %902 = vmatprep.subr.bf16.mxu0 0
    %903 = vmatpush2.bf16.msra.mxu0 0
    %904 = vmatprep.subr.bf16.mxu0 0
    %905 = vmatpush2.bf16.msra.mxu0 0
    %906 = vmatprep.subr.bf16.mxu0 0
    %907 = vmatpush2.bf16.msra.mxu0 0
    %908 = vmatprep.mubr.bf16.mxu0 0
    %909 = vmatmul.mubr.bf16.gmra.mxu0 %v745
    %v910 = vpop.f32.mrf.mxu0
    %v911 = vadd.f32 %v868, %v910
    %v912 = vpop.f32.mrf.mxu0
    %v913 = vadd.f32 %v870, %v912
    %v914 = vpop.f32.mrf.mxu0
    %v915 = vadd.f32 %v872, %v914
    %v916 = vpop.f32.mrf.mxu0
    %v917 = vadd.f32 %v874, %v916
    %918 = vdwg.mxu0
    %v919 = vmax.f32 %v911, 0.0
    %v920 = vmax.f32 %v913, 0.0
    %v921 = vmax.f32 %v915, 0.0
    %v922 = vmax.f32 %v917, 0.0
    %v923 = vpack.c.bf16 %v921, %v919
    %v924 = vpack.c.bf16 %v922, %v920
    %v925 = vld [vmem:[#allocation7] sm:$0xf]
    %v926 = vld [vmem:[#allocation7 + $0x4] sm:$0xf]
    %v927 = vld [vmem:[#allocation7 + $0x8] sm:$0xf]
    %v928 = vld [vmem:[#allocation7 + $0xc] sm:$0xf]
    %v929 = vld [vmem:[#allocation7 + $0x10] sm:$0xf]
    %v930 = vld [vmem:[#allocation7 + $0x14] sm:$0xf]
    %v931 = vld [vmem:[#allocation7 + $0x18] sm:$0xf]
    %v932 = vld [vmem:[#allocation7 + $0x1c] sm:$0xf]
    %v933 = vld [vmem:[#allocation7 + $0x20] sm:$0xf]
    %v934 = vld [vmem:[#allocation7 + $0x24] sm:$0xf]
    %v935 = vld [vmem:[#allocation7 + $0x28] sm:$0xf]
    %v936 = vld [vmem:[#allocation7 + $0x2c] sm:$0xf]
    %v937 = vld [vmem:[#allocation7 + $0x30] sm:$0xf]
    %v938 = vld [vmem:[#allocation7 + $0x34] sm:$0xf]
    %v939 = vld [vmem:[#allocation7 + $0x38] sm:$0xf]
    %v940 = vld [vmem:[#allocation7 + $0x3c] sm:$0xf]
    %v941 = vld [vmem:[#allocation7 + $0x40] sm:$0xf]
    %v942 = vld [vmem:[#allocation7 + $0x44] sm:$0xf]
    %v943 = vld [vmem:[#allocation7 + $0x48] sm:$0xf]
    %v944 = vld [vmem:[#allocation7 + $0x4c] sm:$0xf]
    %v945 = vld [vmem:[#allocation7 + $0x50] sm:$0xf]
    %v946 = vld [vmem:[#allocation7 + $0x54] sm:$0xf]
    %v947 = vld [vmem:[#allocation7 + $0x58] sm:$0xf]
    %v948 = vld [vmem:[#allocation7 + $0x5c] sm:$0xf]
    %v949 = vld [vmem:[#allocation7 + $0x60] sm:$0xf]
    %v950 = vld [vmem:[#allocation7 + $0x64] sm:$0xf]
    %v951 = vld [vmem:[#allocation7 + $0x68] sm:$0xf]
    %v952 = vld [vmem:[#allocation7 + $0x6c] sm:$0xf]
    %v953 = vld [vmem:[#allocation7 + $0x70] sm:$0xf]
    %v954 = vld [vmem:[#allocation7 + $0x74] sm:$0xf]
    %v955 = vld [vmem:[#allocation7 + $0x78] sm:$0xf]
    %v956 = vld [vmem:[#allocation7 + $0x7c] sm:$0xf]
    %v957 = vld [vmem:[%s4] sm:$0x1]
    %v959 = vlaneseq
    %v960 = vshrl.u32 %v959, 7
    %v961 = vsub.s32 0, %v960
    %v962 = vrot.slane %v957, %v961
    %v996 = vunpack.c.l.b16 %v925
    %v997 = vunpack.c.l.b16 %v926
    %v998 = vunpack.c.l.b16 %v927
    %v999 = vunpack.c.l.b16 %v928
    %v1000 = vunpack.c.l.b16 %v929
    %v1001 = vunpack.c.l.b16 %v930
    %v1002 = vunpack.c.l.b16 %v931
    %v1003 = vunpack.c.l.b16 %v932
    %v1004 = vunpack.c.l.b16 %v933
    %v1005 = vunpack.c.l.b16 %v934
    %v1006 = vunpack.c.l.b16 %v935
    %v1007 = vunpack.c.l.b16 %v936
    %v1008 = vunpack.c.l.b16 %v937
    %v1009 = vunpack.c.l.b16 %v938
    %v1010 = vunpack.c.l.b16 %v939
    %v1011 = vunpack.c.l.b16 %v940
    %v1012 = vunpack.c.l.b16 %v941
    %v1013 = vunpack.c.l.b16 %v942
    %v1014 = vunpack.c.l.b16 %v943
    %v1015 = vunpack.c.l.b16 %v944
    %v1016 = vunpack.c.l.b16 %v945
    %v1017 = vunpack.c.l.b16 %v946
    %v1018 = vunpack.c.l.b16 %v947
    %v1019 = vunpack.c.l.b16 %v948
    %v1020 = vunpack.c.l.b16 %v949
    %v1021 = vunpack.c.l.b16 %v950
    %v1022 = vunpack.c.l.b16 %v951
    %v1023 = vunpack.c.l.b16 %v952
    %v1024 = vunpack.c.l.b16 %v953
    %v1025 = vunpack.c.l.b16 %v954
    %v1026 = vunpack.c.l.b16 %v955
    %v1027 = vunpack.c.l.b16 %v956
    %v1028 = vpack.c.b16 %v997, %v996
    %v1029 = vpack.c.b16 %v999, %v998
    %v1030 = vpack.c.b16 %v1001, %v1000
    %v1031 = vpack.c.b16 %v1003, %v1002
    %v1032 = vpack.c.b16 %v1005, %v1004
    %v1033 = vpack.c.b16 %v1007, %v1006
    %v1034 = vpack.c.b16 %v1009, %v1008
    %v1035 = vpack.c.b16 %v1011, %v1010
    %v1036 = vpack.c.b16 %v1013, %v1012
    %v1037 = vpack.c.b16 %v1015, %v1014
    %v1038 = vpack.c.b16 %v1017, %v1016
    %v1039 = vpack.c.b16 %v1019, %v1018
    %v1040 = vpack.c.b16 %v1021, %v1020
    %v1041 = vpack.c.b16 %v1023, %v1022
    %v1042 = vpack.c.b16 %v1025, %v1024
    %v1043 = vpack.c.b16 %v1027, %v1026
    %1060 = vmatprep.subr.bf16.mxu0 0
    %1061 = vmatpush1.bf16.msra.mxu0 %v1035
    %1062 = vmatprep.subr.bf16.mxu0 0
    %1063 = vmatpush1.bf16.msra.mxu0 %v1034
    %1064 = vmatprep.subr.bf16.mxu0 0
    %1065 = vmatpush1.bf16.msra.mxu0 %v1033
    %1066 = vmatprep.subr.bf16.mxu0 0
    %1067 = vmatpush1.bf16.msra.mxu0 %v1032
    %1068 = vmatprep.subr.bf16.mxu0 0
    %1069 = vmatpush1.bf16.msra.mxu0 %v1031
    %1070 = vmatprep.subr.bf16.mxu0 0
    %1071 = vmatpush1.bf16.msra.mxu0 %v1030
    %1072 = vmatprep.subr.bf16.mxu0 0
    %1073 = vmatpush1.bf16.msra.mxu0 %v1029
    %1074 = vmatprep.subr.bf16.mxu0 0
    %1075 = vmatpush1.bf16.msra.mxu0 %v1028
    %1076 = vmatprep.subr.bf16.mxu0 0
    %1077 = vmatpush2.bf16.msra.mxu0 %v1043
    %1078 = vmatprep.subr.bf16.mxu0 0
    %1079 = vmatpush2.bf16.msra.mxu0 %v1042
    %1080 = vmatprep.subr.bf16.mxu0 0
    %1081 = vmatpush2.bf16.msra.mxu0 %v1041
    %1082 = vmatprep.subr.bf16.mxu0 0
    %1083 = vmatpush2.bf16.msra.mxu0 %v1040
    %1084 = vmatprep.subr.bf16.mxu0 0
    %1085 = vmatpush2.bf16.msra.mxu0 %v1039
    %1086 = vmatprep.subr.bf16.mxu0 0
    %1087 = vmatpush2.bf16.msra.mxu0 %v1038
    %1088 = vmatprep.subr.bf16.mxu0 0
    %1089 = vmatpush2.bf16.msra.mxu0 %v1037
    %1090 = vmatprep.subr.bf16.mxu0 0
    %1091 = vmatpush2.bf16.msra.mxu0 %v1036
    %1092 = vmatprep.mubr.bf16.mxu0 %v924
    %1093 = vmatmul.mubr.bf16.gmra.mxu0 %v923
    %v1094 = vpop.f32.mrf.mxu0
    %v1095 = vadd.f32 %v962, %v1094
    %v1096 = vpop.f32.mrf.mxu0
    %v1097 = vpop.f32.mrf.mxu0
    %v1098 = vadd.f32 %v962, %v1097
    %v1099 = vpop.f32.mrf.mxu0
    %1100 = vdwg.mxu0
    %v1101 = vmax.f32 %v1095, 0.0
    %v1102 = vmax.f32 %v1098, 0.0
    %v1103 = vpack.c.bf16 %v1102, %v1101
    %v1104 = vld [vmem:[#allocation8] sm:$0xf]
    %v1105 = vld [vmem:[#allocation8 + $0x4] sm:$0xf]
    %v1106 = vld [vmem:[#allocation8 + $0x8] sm:$0xf]
    %v1107 = vld [vmem:[#allocation8 + $0xc] sm:$0xf]
    %v1108 = vld [vmem:[#allocation8 + $0x10] sm:$0xf]
    %v1109 = vld [vmem:[#allocation8 + $0x14] sm:$0xf]
    %v1110 = vld [vmem:[#allocation8 + $0x18] sm:$0xf]
    %v1111 = vld [vmem:[#allocation8 + $0x1c] sm:$0xf]
    %v1112 = vld [vmem:[#allocation8 + $0x20] sm:$0xf]
    %v1113 = vld [vmem:[#allocation8 + $0x24] sm:$0xf]
    %v1114 = vld [vmem:[#allocation8 + $0x28] sm:$0xf]
    %v1115 = vld [vmem:[#allocation8 + $0x2c] sm:$0xf]
    %v1116 = vld [vmem:[#allocation8 + $0x30] sm:$0xf]
    %v1117 = vld [vmem:[#allocation8 + $0x34] sm:$0xf]
    %v1118 = vld [vmem:[#allocation8 + $0x38] sm:$0xf]
    %v1119 = vld [vmem:[#allocation8 + $0x3c] sm:$0xf]
    %v1120 = vld [vmem:[%s6] sm:$0x1]
    %v1122 = vlaneseq
    %v1123 = vshrl.u32 %v1122, 7
    %v1124 = vsub.s32 0, %v1123
    %v1125 = vrot.slane %v1120, %v1124
    %v1143 = vunpack.c.l.b16 %v1104
    %v1144 = vunpack.c.l.b16 %v1105
    %v1145 = vunpack.c.l.b16 %v1106
    %v1146 = vunpack.c.l.b16 %v1107
    %v1147 = vunpack.c.l.b16 %v1108
    %v1148 = vunpack.c.l.b16 %v1109
    %v1149 = vunpack.c.l.b16 %v1110
    %v1150 = vunpack.c.l.b16 %v1111
    %v1151 = vunpack.c.l.b16 %v1112
    %v1152 = vunpack.c.l.b16 %v1113
    %v1153 = vunpack.c.l.b16 %v1114
    %v1154 = vunpack.c.l.b16 %v1115
    %v1155 = vunpack.c.l.b16 %v1116
    %v1156 = vunpack.c.l.b16 %v1117
    %v1157 = vunpack.c.l.b16 %v1118
    %v1158 = vunpack.c.l.b16 %v1119
    %v1159 = vpack.c.b16 %v1144, %v1143
    %v1160 = vpack.c.b16 %v1146, %v1145
    %v1161 = vpack.c.b16 %v1148, %v1147
    %v1162 = vpack.c.b16 %v1150, %v1149
    %v1163 = vpack.c.b16 %v1152, %v1151
    %v1164 = vpack.c.b16 %v1154, %v1153
    %v1165 = vpack.c.b16 %v1156, %v1155
    %v1166 = vpack.c.b16 %v1158, %v1157
    %1175 = vmatprep.subr.bf16.mxu0 0
    %1176 = vmatpush1.bf16.msra.mxu0 %v1166
    %1177 = vmatprep.subr.bf16.mxu0 0
    %1178 = vmatpush1.bf16.msra.mxu0 %v1165
    %1179 = vmatprep.subr.bf16.mxu0 0
    %1180 = vmatpush1.bf16.msra.mxu0 %v1164
    %1181 = vmatprep.subr.bf16.mxu0 0
    %1182 = vmatpush1.bf16.msra.mxu0 %v1163
    %1183 = vmatprep.subr.bf16.mxu0 0
    %1184 = vmatpush1.bf16.msra.mxu0 %v1162
    %1185 = vmatprep.subr.bf16.mxu0 0
    %1186 = vmatpush1.bf16.msra.mxu0 %v1161
    %1187 = vmatprep.subr.bf16.mxu0 0
    %1188 = vmatpush1.bf16.msra.mxu0 %v1160
    %1189 = vmatprep.subr.bf16.mxu0 0
    %1190 = vmatpush1.bf16.msra.mxu0 %v1159
    %1191 = vmatprep.subr.bf16.mxu0 0
    %1192 = vmatpush2.bf16.msra.mxu0 0
    %1193 = vmatprep.subr.bf16.mxu0 0
    %1194 = vmatpush2.bf16.msra.mxu0 0
    %1195 = vmatprep.subr.bf16.mxu0 0
    %1196 = vmatpush2.bf16.msra.mxu0 0
    %1197 = vmatprep.subr.bf16.mxu0 0
    %1198 = vmatpush2.bf16.msra.mxu0 0
    %1199 = vmatprep.subr.bf16.mxu0 0
    %1200 = vmatpush2.bf16.msra.mxu0 0
    %1201 = vmatprep.subr.bf16.mxu0 0
    %1202 = vmatpush2.bf16.msra.mxu0 0
    %1203 = vmatprep.subr.bf16.mxu0 0
    %1204 = vmatpush2.bf16.msra.mxu0 0
    %1205 = vmatprep.subr.bf16.mxu0 0
    %1206 = vmatpush2.bf16.msra.mxu0 0
    %1207 = vmatprep.mubr.bf16.mxu0 0
    %1208 = vmatmul.mubr.bf16.gmra.mxu0 %v1103
    %v1209 = vpop.f32.mrf.mxu0
    %v1210 = vadd.f32 %v1125, %v1209
    %v1211 = vpop.f32.mrf.mxu0
    %v1212 = vpop.f32.mrf.mxu0
    %v1213 = vadd.f32 %v1125, %v1212
    %v1214 = vpop.f32.mrf.mxu0
    %1215 = vdwg.mxu0
    %v1216 = vmax.f32 %v1210, 0.0
    %v1217 = vmax.f32 %v1213, 0.0
    %v1218 = vpack.c.bf16 %v1217, %v1216
    %v1219 = vld [vmem:[#allocation10] sm:$0xf]
    %v1220 = vld [vmem:[#allocation10 + $0x4] sm:$0xf]
    %v1221 = vld [vmem:[#allocation10 + $0x8] sm:$0xf]
    %v1222 = vld [vmem:[#allocation10 + $0xc] sm:$0xf]
    %v1223 = vld [vmem:[#allocation10 + $0x10] sm:$0xf]
    %v1224 = vld [vmem:[#allocation10 + $0x14] sm:$0xf]
    %v1225 = vld [vmem:[#allocation10 + $0x18] sm:$0xf]
    %v1226 = vld [vmem:[#allocation10 + $0x1c] sm:$0xf]
    %v1227 = vld [vmem:[#allocation10 + $0x20] sm:$0xf]
    %v1228 = vld [vmem:[#allocation10 + $0x24] sm:$0xf]
    %v1229 = vld [vmem:[#allocation10 + $0x28] sm:$0xf]
    %v1230 = vld [vmem:[#allocation10 + $0x2c] sm:$0xf]
    %v1231 = vld [vmem:[#allocation10 + $0x30] sm:$0xf]
    %v1232 = vld [vmem:[#allocation10 + $0x34] sm:$0xf]
    %v1233 = vld [vmem:[#allocation10 + $0x38] sm:$0xf]
    %v1234 = vld [vmem:[#allocation10 + $0x3c] sm:$0xf]
    %v1235 = vld [vmem:[%s8] sm:$0x1]
    %v1237 = vlaneseq
    %v1238 = vshrl.u32 %v1237, 7
    %v1239 = vsub.s32 0, %v1238
    %v1240 = vrot.slane %v1235, %v1239
    %v1258 = vunpack.c.l.b16 %v1219
    %v1259 = vunpack.c.l.b16 %v1220
    %v1260 = vunpack.c.l.b16 %v1221
    %v1261 = vunpack.c.l.b16 %v1222
    %v1262 = vunpack.c.l.b16 %v1223
    %v1263 = vunpack.c.l.b16 %v1224
    %v1264 = vunpack.c.l.b16 %v1225
    %v1265 = vunpack.c.l.b16 %v1226
    %v1266 = vunpack.c.l.b16 %v1227
    %v1267 = vunpack.c.l.b16 %v1228
    %v1268 = vunpack.c.l.b16 %v1229
    %v1269 = vunpack.c.l.b16 %v1230
    %v1270 = vunpack.c.l.b16 %v1231
    %v1271 = vunpack.c.l.b16 %v1232
    %v1272 = vunpack.c.l.b16 %v1233
    %v1273 = vunpack.c.l.b16 %v1234
    %v1274 = vpack.c.b16 %v1259, %v1258
    %v1275 = vpack.c.b16 %v1261, %v1260
    %v1276 = vpack.c.b16 %v1263, %v1262
    %v1277 = vpack.c.b16 %v1265, %v1264
    %v1278 = vpack.c.b16 %v1267, %v1266
    %v1279 = vpack.c.b16 %v1269, %v1268
    %v1280 = vpack.c.b16 %v1271, %v1270
    %v1281 = vpack.c.b16 %v1273, %v1272
    %1290 = vmatprep.subr.bf16.mxu0 0
    %1291 = vmatpush1.bf16.msra.mxu0 %v1281
    %1292 = vmatprep.subr.bf16.mxu0 0
    %1293 = vmatpush1.bf16.msra.mxu0 %v1280
    %1294 = vmatprep.subr.bf16.mxu0 0
    %1295 = vmatpush1.bf16.msra.mxu0 %v1279
    %1296 = vmatprep.subr.bf16.mxu0 0
    %1297 = vmatpush1.bf16.msra.mxu0 %v1278
    %1298 = vmatprep.subr.bf16.mxu0 0
    %1299 = vmatpush1.bf16.msra.mxu0 %v1277
    %1300 = vmatprep.subr.bf16.mxu0 0
    %1301 = vmatpush1.bf16.msra.mxu0 %v1276
    %1302 = vmatprep.subr.bf16.mxu0 0
    %1303 = vmatpush1.bf16.msra.mxu0 %v1275
    %1304 = vmatprep.subr.bf16.mxu0 0
    %1305 = vmatpush1.bf16.msra.mxu0 %v1274
    %1306 = vmatprep.subr.bf16.mxu0 0
    %1307 = vmatpush2.bf16.msra.mxu0 0
    %1308 = vmatprep.subr.bf16.mxu0 0
    %1309 = vmatpush2.bf16.msra.mxu0 0
    %1310 = vmatprep.subr.bf16.mxu0 0
    %1311 = vmatpush2.bf16.msra.mxu0 0
    %1312 = vmatprep.subr.bf16.mxu0 0
    %1313 = vmatpush2.bf16.msra.mxu0 0
    %1314 = vmatprep.subr.bf16.mxu0 0
    %1315 = vmatpush2.bf16.msra.mxu0 0
    %1316 = vmatprep.subr.bf16.mxu0 0
    %1317 = vmatpush2.bf16.msra.mxu0 0
    %1318 = vmatprep.subr.bf16.mxu0 0
    %1319 = vmatpush2.bf16.msra.mxu0 0
    %1320 = vmatprep.subr.bf16.mxu0 0
    %1321 = vmatpush2.bf16.msra.mxu0 0
    %1322 = vmatprep.mubr.bf16.mxu0 0
    %1323 = vmatmul.mubr.bf16.gmra.mxu0 %v1218
    %v1324 = vpop.f32.mrf.mxu0
    %v1325 = vadd.f32 %v1240, %v1324
    %v1326 = vpop.f32.mrf.mxu0
    %v1327 = vpop.f32.mrf.mxu0
    %v1328 = vadd.f32 %v1240, %v1327
    %v1329 = vpop.f32.mrf.mxu0
    %1330 = vdwg.mxu0
    %v1331 = vmax.f32 %v1325, 0.0
    %v1332 = vmax.f32 %v1328, 0.0
    %v1333 = vpack.c.bf16 %v1332, %v1331
    %v1334 = vld [vmem:[#allocation11] sm:$0xf]
    %v1335 = vld [vmem:[#allocation11 + $0x4] sm:$0xf]
    %v1336 = vld [vmem:[#allocation11 + $0x8] sm:$0xf]
    %v1337 = vld [vmem:[#allocation11 + $0xc] sm:$0xf]
    %v1338 = vld [vmem:[#allocation11 + $0x10] sm:$0xf]
    %v1339 = vld [vmem:[#allocation11 + $0x14] sm:$0xf]
    %v1340 = vld [vmem:[#allocation11 + $0x18] sm:$0xf]
    %v1341 = vld [vmem:[#allocation11 + $0x1c] sm:$0xf]
    %v1342 = vld [vmem:[#allocation11 + $0x20] sm:$0xf]
    %v1343 = vld [vmem:[#allocation11 + $0x24] sm:$0xf]
    %v1344 = vld [vmem:[#allocation11 + $0x28] sm:$0xf]
    %v1345 = vld [vmem:[#allocation11 + $0x2c] sm:$0xf]
    %v1346 = vld [vmem:[#allocation11 + $0x30] sm:$0xf]
    %v1347 = vld [vmem:[#allocation11 + $0x34] sm:$0xf]
    %v1348 = vld [vmem:[#allocation11 + $0x38] sm:$0xf]
    %v1349 = vld [vmem:[#allocation11 + $0x3c] sm:$0xf]
    %v1350 = vld [vmem:[%s10] sm:$0x1]
    %v1352 = vlaneseq
    %v1353 = vshrl.u32 %v1352, 7
    %v1354 = vsub.s32 0, %v1353
    %v1355 = vrot.slane %v1350, %v1354
    %v1373 = vunpack.c.l.b16 %v1334
    %v1374 = vunpack.c.l.b16 %v1335
    %v1375 = vunpack.c.l.b16 %v1336
    %v1376 = vunpack.c.l.b16 %v1337
    %v1377 = vunpack.c.l.b16 %v1338
    %v1378 = vunpack.c.l.b16 %v1339
    %v1379 = vunpack.c.l.b16 %v1340
    %v1380 = vunpack.c.l.b16 %v1341
    %v1381 = vunpack.c.l.b16 %v1342
    %v1382 = vunpack.c.l.b16 %v1343
    %v1383 = vunpack.c.l.b16 %v1344
    %v1384 = vunpack.c.l.b16 %v1345
    %v1385 = vunpack.c.l.b16 %v1346
    %v1386 = vunpack.c.l.b16 %v1347
    %v1387 = vunpack.c.l.b16 %v1348
    %v1388 = vunpack.c.l.b16 %v1349
    %v1389 = vpack.c.b16 %v1374, %v1373
    %v1390 = vpack.c.b16 %v1376, %v1375
    %v1391 = vpack.c.b16 %v1378, %v1377
    %v1392 = vpack.c.b16 %v1380, %v1379
    %v1393 = vpack.c.b16 %v1382, %v1381
    %v1394 = vpack.c.b16 %v1384, %v1383
    %v1395 = vpack.c.b16 %v1386, %v1385
    %v1396 = vpack.c.b16 %v1388, %v1387
    %1405 = vmatprep.subr.bf16.mxu0 0
    %1406 = vmatpush1.bf16.msra.mxu0 %v1396
    %1407 = vmatprep.subr.bf16.mxu0 0
    %1408 = vmatpush1.bf16.msra.mxu0 %v1395
    %1409 = vmatprep.subr.bf16.mxu0 0
    %1410 = vmatpush1.bf16.msra.mxu0 %v1394
    %1411 = vmatprep.subr.bf16.mxu0 0
    %1412 = vmatpush1.bf16.msra.mxu0 %v1393
    %1413 = vmatprep.subr.bf16.mxu0 0
    %1414 = vmatpush1.bf16.msra.mxu0 %v1392
    %1415 = vmatprep.subr.bf16.mxu0 0
    %1416 = vmatpush1.bf16.msra.mxu0 %v1391
    %1417 = vmatprep.subr.bf16.mxu0 0
    %1418 = vmatpush1.bf16.msra.mxu0 %v1390
    %1419 = vmatprep.subr.bf16.mxu0 0
    %1420 = vmatpush1.bf16.msra.mxu0 %v1389
    %1421 = vmatprep.subr.bf16.mxu0 0
    %1422 = vmatpush2.bf16.msra.mxu0 0
    %1423 = vmatprep.subr.bf16.mxu0 0
    %1424 = vmatpush2.bf16.msra.mxu0 0
    %1425 = vmatprep.subr.bf16.mxu0 0
    %1426 = vmatpush2.bf16.msra.mxu0 0
    %1427 = vmatprep.subr.bf16.mxu0 0
    %1428 = vmatpush2.bf16.msra.mxu0 0
    %1429 = vmatprep.subr.bf16.mxu0 0
    %1430 = vmatpush2.bf16.msra.mxu0 0
    %1431 = vmatprep.subr.bf16.mxu0 0
    %1432 = vmatpush2.bf16.msra.mxu0 0
    %1433 = vmatprep.subr.bf16.mxu0 0
    %1434 = vmatpush2.bf16.msra.mxu0 0
    %1435 = vmatprep.subr.bf16.mxu0 0
    %1436 = vmatpush2.bf16.msra.mxu0 0
    %1437 = vmatprep.mubr.bf16.mxu0 0
    %1438 = vmatmul.mubr.bf16.gmra.mxu0 %v1333
    %v1439 = vpop.f32.mrf.mxu0
    %v1440 = vadd.f32 %v1355, %v1439
    %v1441 = vpop.f32.mrf.mxu0
    %v1442 = vpop.f32.mrf.mxu0
    %v1443 = vadd.f32 %v1355, %v1442
    %v1444 = vpop.f32.mrf.mxu0
    %1445 = vdwg.mxu0
    %1446 = vmax.xlane.f32.xlu0 %v1440
    %v1447 = vpop.xlane.xlu0 %1446
    %1448 = vmax.xlane.f32.xlu0 %v1443
    %v1449 = vpop.xlane.xlu0 %1448
    %v1450 = vsub.f32 %v1440, %v1447
    %v1451 = vsub.f32 %v1443, %v1449
    %v1452 = vmul.f32 %v1450, 1.442695
    %v1453 = vpow.pop %v1452
    %v1454 = vmul.f32 %v1451, 1.442695
    %v1455 = vpow.pop %v1454
    %1456 = vadd.xlane.f32.xlu0 %v1453
    %v1457 = vpop.xlane.xlu0 %1456
    %1458 = vadd.xlane.f32.xlu0 %v1455
    %v1459 = vpop.xlane.xlu0 %1458
    %v1460 = vlog2.pop %v1457
    %v1461 = vmul.f32 %v1460, 0.6931472
    %v1462 = vlog2.pop %v1459
    %v1463 = vmul.f32 %v1462, 0.6931472
    %v1464 = vsub.f32 %v1450, %v1461
    %v1465 = vsub.f32 %v1451, %v1463
    %1466 = vst [vmem:[#allocation13] sm:$0xff] %v1464
    %1467 = vst [vmem:[#allocation13 + $0x8] sm:$0xff] %v1465
    // Predicated region
    $region70: #{mlp_forward.1} parent=1 // pred_check
      _
    $region71: #{mlp_forward.1} parent=1 // pred_check_branch
      %1469 = sbr.rel (0) target = $region73
    $region72: #{mlp_forward.1} parent=1 // pred_region
      %s1471 = ssub.s32 256, 256
      %1472 = vsyncadd [#allocation4], %s1471
      %s1473 = sshll.u32 [#allocation13], 4
      %s1474 = int_to_ptr.vmem [resolvable:$true] %s1473
      %1479 = dma.vmem_to_hbm [thread:$0]  %s1474, 256, %s11, [#allocation4], 128, 128, 8
    $region73: #{mlp_forward.1} parent=1 // pred_fallthru
      _
    // Predicated region
    $region74: #{mlp_forward.1} parent=1 // pred_check
      _
    $region75: #{mlp_forward.1} parent=1 // pred_check_branch
      %1481 = sbr.rel (0) target = $region77
    $region76: #{mlp_forward.1} parent=1 // pred_region
      %1482 = dma.done [#allocation4], 256
    $region77: #{mlp_forward.1} parent=1 // pred_fallthru
      _
    %1483 = vsyncpa [#allocation3], 1
    %1484 = vsyncpa [#allocation6], 1
    %1485 = vsyncpa [#allocation9], 1
    %1486 = vsyncpa [#allocation12], 1
    %1487 = vsyncpa [#allocation4], 1

</llo_original>
